<compile_context>
chip_gen: v5e
topology: v5e:2x2
jax: 0.10.0
libtpu: 0.0.40
codegen_flags: <defaults>
</compile_context>

<pallas_src>
import jax
import jax.numpy as jnp
import numpy as np
from jax.experimental import pallas as pl
from jax.experimental.pallas import tpu as pltpu


_VMEM_LIMIT = 48 * 1024 * 1024   # headroom below v7x's 64 MiB physical VMEM; safe on v5e/v6e too


def _round_up(x, m):
    return ((x + m - 1) // m) * m


# ----------------------------------------------------------------------------
# Pass 1 / Pass 3: row + lane tiled dense projection  (M, K) @ (K, N) + (1, N)
# ----------------------------------------------------------------------------
def _linear_kernel(x_ref, w_ref, b_ref, o_ref):
    # bf16 MXU operands, f32 accumulate; bias added in f32.
    acc = jnp.dot(x_ref[...].astype(jnp.bfloat16), w_ref[...],
                  preferred_element_type=jnp.float32)
    o_ref[...] = (acc + b_ref[...]).astype(o_ref.dtype)


def linear_pallas(x2d, w_bf16, b_f32, out_dtype, tile_m=256):
    """(M, K) @ (K, N) + (1, N) -> (M, N).  w_bf16: (K, N) bf16, b_f32: (1, N) f32."""
    M, K = x2d.shape
    N = w_bf16.shape[1]

    if M <= tile_m:
        tile_m_eff, Mp = M, M                       # single full row block (exempt from 8-rule)
    else:
        tile_m_eff = tile_m
        Mp = pl.cdiv(M, tile_m_eff) * tile_m_eff
        if Mp != M:
            x2d = jnp.pad(x2d, ((0, Mp - M), (0, 0)))

    # Lane tiling of N (wrapper pads N to a multiple of 128).
    if N % 256 == 0:
        tn = 256
    elif N % 128 == 0:
        tn = 128
    else:
        tn = N
    n_tiles = N // tn

    if n_tiles == 1:
        # Constant-index weight/bias blocks: single-buffer to halve their VMEM footprint.
        w_spec = pl.BlockSpec((K, tn), lambda i, j: (0, j), pipeline_mode=pl.Buffered(1))
        b_spec = pl.BlockSpec((1, tn), lambda i, j: (0, j), pipeline_mode=pl.Buffered(1))
    else:
        w_spec = pl.BlockSpec((K, tn), lambda i, j: (0, j))
        b_spec = pl.BlockSpec((1, tn), lambda i, j: (0, j))

    # TODO(synk): for very large K, add a K grid axis with a VMEM f32 accumulator
    #             (pl.when init/finalize) instead of taking the whole K per block.
    out = pl.pallas_call(
        _linear_kernel,
        out_shape=jax.ShapeDtypeStruct((Mp, N), out_dtype),
        grid_spec=pltpu.PrefetchScalarGridSpec(
            num_scalar_prefetch=0,
            grid=(Mp // tile_m_eff, n_tiles),
            in_specs=[
                pl.BlockSpec((tile_m_eff, K), lambda i, j: (i, 0)),
                w_spec,
                b_spec,
            ],
            out_specs=pl.BlockSpec((tile_m_eff, tn), lambda i, j: (i, j)),
        ),
        compiler_params=pltpu.CompilerParams(
            dimension_semantics=("parallel", "parallel"),
            vmem_limit_bytes=_VMEM_LIMIT,
        ),
    )(x2d, w_bf16, b_f32)
    return out[:M]


# ----------------------------------------------------------------------------
# Pass 2: sequential LSTM recurrence, TILE_T timesteps per grid step
# ----------------------------------------------------------------------------
def _lstm_recurrent_kernel(xg_ref, whh_ref, hs_ref, h_sc, c_sc):
    # xg_ref:  (TILE_T, TILE_B, 4Hp) bf16   precomputed x@W_ih^T + (b_ih + b_hh)
    # whh_ref: (Hp, 4Hp) bf16               resident recurrent weight (single-buffered)
    # hs_ref:  (TILE_T, TILE_B, Hp) bf16    hidden states written per step
    # h_sc/c_sc: (TILE_B, Hp) f32           state carried across time-grid steps
    @pl.when(pl.program_id(1) == 0)
    def _():
        h_sc[...] = jnp.zeros_like(h_sc)
        c_sc[...] = jnp.zeros_like(c_sc)

    hp = h_sc.shape[1]
    tile_t = xg_ref.shape[0]
    whh = whh_ref[...]

    def sigmoid_eup(z):
        # one EUP op (tanh) per gate instead of exp + divide
        return 0.5 * jnp.tanh(0.5 * z) + 0.5

    def step(s, carry):
        h, c = carry                                            # f32 (TILE_B, Hp)
        gates = (xg_ref[s].astype(jnp.float32)
                 + jnp.dot(h.astype(jnp.bfloat16), whh,
                           preferred_element_type=jnp.float32))  # (TILE_B, 4Hp) f32
        # Hp is a multiple of 128 -> each gate slice is a whole lane tile (no XLU relayout).
        i_g = sigmoid_eup(gates[:, 0:hp])
        f_g = sigmoid_eup(gates[:, hp:2 * hp])
        g_g = jnp.tanh(gates[:, 2 * hp:3 * hp])
        o_g = sigmoid_eup(gates[:, 3 * hp:4 * hp])
        c = f_g * c + i_g * g_g
        h = o_g * jnp.tanh(c)
        hs_ref[s] = h.astype(hs_ref.dtype)
        return (h, c)

    # fori_loop(unroll=True): LLO scheduler visibility with bounded vreg live ranges.
    h, c = jax.lax.fori_loop(0, tile_t, step, (h_sc[...], c_sc[...]), unroll=True)
    h_sc[...] = h
    c_sc[...] = c


def lstm_decoder_pallas(x, params, tile_t=32, num_cores=1):
    """x: (B, T, d_model) batch_first (PyTorch convention). Returns (B, T, num_classes) f32."""
    B, T, D = x.shape
    w_ih_t = params["w_ih_t"]      # (D, 4H)  f32
    w_hh_t = params["w_hh_t"]      # (H, 4H)  f32
    b = params["b"]                # (1, 4H)  f32  == b_ih + b_hh
    w_out_t = params["w_out_t"]    # (H, C)   f32
    b_out = params["b_out"]        # (1, C)   f32
    H = w_hh_t.shape[0]
    C = w_out_t.shape[1]

    # ---- lane alignment: pad hidden and class dims to multiples of 128 ----
    Hp = _round_up(H, 128)
    Cp = _round_up(C, 128)

    def pad_gates(a):   # (..., 4H) -> (..., 4Hp): pad each gate segment separately
        lead = a.shape[:-1]
        a4 = a.reshape(lead + (4, H))
        a4 = jnp.pad(a4, [(0, 0)] * len(lead) + [(0, 0), (0, Hp - H)])
        return a4.reshape(lead + (4 * Hp,))

    w_ih_p = pad_gates(w_ih_t).astype(jnp.bfloat16)                                   # (D, 4Hp)
    b_p = pad_gates(b)                                                                # (1, 4Hp) f32
    w_hh_p = pad_gates(jnp.pad(w_hh_t, ((0, Hp - H), (0, 0)))).astype(jnp.bfloat16)   # (Hp, 4Hp)
    w_out_p = jnp.pad(w_out_t, ((0, Hp - H), (0, Cp - C))).astype(jnp.bfloat16)       # (Hp, Cp)
    b_out_p = jnp.pad(b_out, ((0, 0), (0, Cp - C)))                                   # (1, Cp) f32

    # ---- time-major + time padding applied to the small input (before Pass 1) ----
    tile_t = min(tile_t, T)
    Tp = pl.cdiv(T, tile_t) * tile_t
    x_tm = jnp.transpose(x, (1, 0, 2))                                                # (T, B, D)
    if Tp != T:
        x_tm = jnp.pad(x_tm, ((0, Tp - T), (0, 0), (0, 0)))

    # ---- Pass 1: input projection (bias folded), xg stored bf16 ----
    xg = linear_pallas(x_tm.reshape(Tp * B, D), w_ih_p, b_p,
                       out_dtype=jnp.bfloat16).reshape(Tp, B, 4 * Hp)

    # ---- Pass 2: recurrence ----
    # Batch split only pays off on 2-TensorCore chips (v7x); on v5e/v6e it just adds
    # grid-step overhead on the serial chain, so the default num_cores=1 keeps nb=1.
    if num_cores >= 2 and B % (8 * num_cores) == 0:
        nb, tile_b = num_cores, B // num_cores
        # TODO(synk): verify the leading 'parallel' axis shards across v7x's 2 TensorCores;
        #             otherwise switch it to pltpu.CORE_PARALLEL / pl.core_map.
    else:
        nb, tile_b = 1, B

    hs = pl.pallas_call(
        _lstm_recurrent_kernel,
        out_shape=jax.ShapeDtypeStruct((Tp, B, Hp), jnp.bfloat16),
        grid_spec=pltpu.PrefetchScalarGridSpec(
            num_scalar_prefetch=0,
            grid=(nb, Tp // tile_t),
            in_specs=[
                pl.BlockSpec((tile_t, tile_b, 4 * Hp), lambda bb, tt: (tt, bb, 0)),   # xg tile
                pl.BlockSpec((Hp, 4 * Hp), lambda bb, tt: (0, 0),
                             pipeline_mode=pl.Buffered(1)),                           # resident W_hh^T
            ],
            out_specs=pl.BlockSpec((tile_t, tile_b, Hp), lambda bb, tt: (tt, bb, 0)),
            scratch_shapes=[
                pltpu.VMEM((tile_b, Hp), jnp.float32),   # h state
                pltpu.VMEM((tile_b, Hp), jnp.float32),   # c state
            ],
        ),
        compiler_params=pltpu.CompilerParams(
            dimension_semantics=("parallel", "arbitrary"),   # time recurrence is sequential
            vmem_limit_bytes=_VMEM_LIMIT,
        ),
    )(xg, w_hh_p)

    # ---- Pass 3: output projection, lane-dense (Cp) output ----
    # Transposing hs (bf16, Hp wide) is cheaper than transposing the f32/Cp-wide logits.
    # TODO(synk): fold this transpose into Pass 3's BlockSpecs (in-kernel leading-dim permute).
    hs_bm = jnp.transpose(hs[:T], (1, 0, 2)).reshape(B * T, Hp)                       # (B*T, Hp) bf16
    logits_p = linear_pallas(hs_bm, w_out_p, b_out_p,
                             out_dtype=jnp.float32).reshape(B, T, Cp)
    return logits_p[:, :, :C]


# ----------------------------------------------------------------------------
# Pure-JAX f32 reference matching nn.LSTM (1 layer, batch_first) + nn.Linear
# ----------------------------------------------------------------------------
def lstm_decoder_reference(x, params):
    w_ih_t, w_hh_t, b = params["w_ih_t"], params["w_hh_t"], params["b"]
    w_out_t, b_out = params["w_out_t"], params["b_out"]
    B, T, D = x.shape
    H = w_hh_t.shape[0]

    def step(carry, x_t):
        h, c = carry
        gates = x_t @ w_ih_t + h @ w_hh_t + b[0]
        i = jax.nn.sigmoid(gates[:, 0:H])
        f = jax.nn.sigmoid(gates[:, H:2 * H])
        g = jnp.tanh(gates[:, 2 * H:3 * H])
        o = jax.nn.sigmoid(gates[:, 3 * H:4 * H])
        c = f * c + i * g
        h = o * jnp.tanh(c)
        return (h, c), h

    h0 = jnp.zeros((B, H), jnp.float32)
    c0 = jnp.zeros((B, H), jnp.float32)
    (_, _), hs = jax.lax.scan(step, (h0, c0), jnp.transpose(x, (1, 0, 2)))
    logits = hs @ w_out_t + b_out[0]             # (T, B, C)
    return jnp.transpose(logits, (1, 0, 2))


def init_params(key, d_model, d_decoder, num_classes):
    """Deterministic init mimicking PyTorch's uniform(-1/sqrt(H), 1/sqrt(H))."""
    ks = jax.random.split(key, 6)
    k_lstm = 1.0 / np.sqrt(d_decoder)
    k_lin = 1.0 / np.sqrt(d_decoder)
    w_ih = jax.random.uniform(ks[0], (4 * d_decoder, d_model), jnp.float32, -k_lstm, k_lstm)
    w_hh = jax.random.uniform(ks[1], (4 * d_decoder, d_decoder), jnp.float32, -k_lstm, k_lstm)
    b_ih = jax.random.uniform(ks[2], (4 * d_decoder,), jnp.float32, -k_lstm, k_lstm)
    b_hh = jax.random.uniform(ks[3], (4 * d_decoder,), jnp.float32, -k_lstm, k_lstm)
    w_out = jax.random.uniform(ks[4], (num_classes, d_decoder), jnp.float32, -k_lin, k_lin)
    b_out = jax.random.uniform(ks[5], (num_classes,), jnp.float32, -k_lin, k_lin)
    return {
        "w_ih_t": w_ih.T,                          # (D, 4H)
        "w_hh_t": w_hh.T,                          # (H, 4H)
        "b": (b_ih + b_hh)[None, :],               # (1, 4H)
        "w_out_t": w_out.T,                        # (H, C)
        "b_out": b_out[None, :],                   # (1, C)
    }


if __name__ == "__main__":
    # Small config consistent with the module: d_model -> LSTM(d_decoder) -> num_classes
    B, T = 2, 8
    d_model, d_decoder, num_classes = 32, 32, 16

    key = jax.random.PRNGKey(0)
    k_x, k_p = jax.random.split(key)
    x = jax.random.normal(k_x, (B, T, d_model), jnp.float32)
    params = init_params(k_p, d_model, d_decoder, num_classes)

    fwd = jax.jit(lambda xx, pp: lstm_decoder_pallas(xx, pp))
    logits = jax.block_until_ready(fwd(x, params))
    ref = jax.block_until_ready(lstm_decoder_reference(x, params))

    assert logits.shape == (B, T, num_classes)
    # bf16 weights/activations on the MXU -> looser tolerance vs the f32 reference.
    np.testing.assert_allclose(np.asarray(logits), np.asarray(ref), rtol=2e-2, atol=5e-2)

    print("KERNEL_OK")
</pallas_src>

<mosaic_0001>
module attributes {stable_mosaic.version = 11 : i64} {
  func.func @_linear_kernel(%arg0: i32, %arg1: i32, %arg2: memref<16x32xf32, #tpu.memory_space<vmem>>, %arg3: memref<32x256xbf16, #tpu.memory_space<vmem>>, %arg4: memref<1x256xf32, #tpu.memory_space<vmem>>, %arg5: memref<16x256xbf16, #tpu.memory_space<vmem>>) attributes {dimension_semantics = [#tpu.dimension_semantics<parallel>, #tpu.dimension_semantics<parallel>], iteration_bounds = array<i64: 1, 2>, scalar_prefetch = 0 : i64, scratch_operands = 0 : i64, tpu.core_type = #tpu.core_type<tc>, window_params = [{transform_indices = @transform_0, window_bounds = array<i64: 16, 32>}, {transform_indices = @transform_1, window_bounds = array<i64: 32, 256>}, {transform_indices = @transform_2, window_bounds = array<i64: 1, 256>}, {transform_indices = @transform_3, window_bounds = array<i64: 16, 256>}]} {
    %c0 = arith.constant 0 : index
    %c0_0 = arith.constant 0 : index
    %0 = vector.load %arg2[%c0, %c0_0] : memref<16x32xf32, #tpu.memory_space<vmem>>, vector<16x32xf32>
    %1 = arith.truncf %0 : vector<16x32xf32> to vector<16x32xbf16>
    %c0_1 = arith.constant 0 : index
    %c0_2 = arith.constant 0 : index
    %2 = vector.load %arg3[%c0_1, %c0_2] : memref<32x256xbf16, #tpu.memory_space<vmem>>, vector<32x256xbf16>
    %cst = arith.constant dense<0.000000e+00> : vector<16x256xf32>
    %3 = tpu.matmul %1, %2, %cst {dimension_numbers = #tpu.dot_dimension_numbers<[1], [0], [0], [1], [0, 0, 1, 1], [], []>} : vector<16x32xbf16>, vector<32x256xbf16>, vector<16x256xf32> -> vector<16x256xf32>
    %c0_3 = arith.constant 0 : index
    %c0_4 = arith.constant 0 : index
    %4 = vector.load %arg4[%c0_3, %c0_4] : memref<1x256xf32, #tpu.memory_space<vmem>>, vector<1x256xf32>
    %5 = vector.broadcast %4 : vector<1x256xf32> to vector<16x256xf32>
    %6 = arith.addf %3, %5 : vector<16x256xf32>
    %7 = arith.truncf %6 : vector<16x256xf32> to vector<16x256xbf16>
    %c0_5 = arith.constant 0 : index
    %c0_6 = arith.constant 0 : index
    %8 = vector.load %arg5[%c0_5, %c0_6] : memref<16x256xbf16, #tpu.memory_space<vmem>>, vector<16x256xbf16>
    tpu.vector_store %arg5[%c0_5, %c0_6], %7 {strides = array<i32>} : memref<16x256xbf16, #tpu.memory_space<vmem>>, vector<16x256xbf16>,
    return
  }
  func.func @transform_0(%arg0: i32, %arg1: i32) -> (i32, i32) {
    %c0_i32 = arith.constant 0 : i32
    %c0_i32_0 = arith.constant 0 : i32
    return %arg0, %c0_i32 : i32, i32
  }
  func.func @transform_1(%arg0: i32, %arg1: i32) -> (i32, i32) {
    %c0_i32 = arith.constant 0 : i32
    %c0_i32_0 = arith.constant 0 : i32
    return %c0_i32, %arg1 : i32, i32
  }
  func.func @transform_2(%arg0: i32, %arg1: i32) -> (i32, i32) {
    %c0_i32 = arith.constant 0 : i32
    %c0_i32_0 = arith.constant 0 : i32
    return %c0_i32, %arg1 : i32, i32
  }
  func.func @transform_3(%arg0: i32, %arg1: i32) -> (i32, i32) {
    %c0_i32 = arith.constant 0 : i32
    return %arg0, %arg1 : i32, i32
  }
}

module attributes {stable_mosaic.version = 11 : i64} {
  func.func @_lstm_recurrent_kernel(%arg0: i32, %arg1: i32, %arg2: memref<8x2x512xbf16, #tpu.memory_space<vmem>>, %arg3: memref<128x512xbf16, #tpu.memory_space<vmem>>, %arg4: memref<8x2x128xbf16, #tpu.memory_space<vmem>>, %arg5: memref<2x128xf32, #tpu.memory_space<vmem>>, %arg6: memref<2x128xf32, #tpu.memory_space<vmem>>) attributes {dimension_semantics = [#tpu.dimension_semantics<parallel>, #tpu.dimension_semantics<arbitrary>], iteration_bounds = array<i64: 1, 1>, scalar_prefetch = 0 : i64, scratch_operands = 2 : i64, tpu.core_type = #tpu.core_type<tc>, window_params = [{transform_indices = @transform_0, window_bounds = array<i64: 8, 2, 512>}, {pipeline_mode = #tpu.pipeline_mode<synchronous>, transform_indices = @transform_1, window_bounds = array<i64: 128, 512>}, {transform_indices = @transform_2, window_bounds = array<i64: 8, 2, 128>}]} {
    %c0_i32 = arith.constant 0 : i32
    %0 = arith.cmpi eq, %arg1, %c0_i32 : i32
    %1 = arith.extui %0 : i1 to i32
    %c0_i32_0 = arith.constant 0 : i32
    %2 = arith.cmpi ne, %1, %c0_i32_0 : i32
    scf.if %2 {
      %cst_122 = arith.constant 0.000000e+00 : f32
      %352 = vector.broadcast %cst_122 : f32 to vector<2x128xf32>
      %c0_123 = arith.constant 0 : index
      %c0_124 = arith.constant 0 : index
      %353 = vector.load %arg5[%c0_123, %c0_124] : memref<2x128xf32, #tpu.memory_space<vmem>>, vector<2x128xf32>
      tpu.vector_store %arg5[%c0_123, %c0_124], %352 {strides = array<i32>} : memref<2x128xf32, #tpu.memory_space<vmem>>, vector<2x128xf32>,
      %cst_125 = arith.constant 0.000000e+00 : f32
      %354 = vector.broadcast %cst_125 : f32 to vector<2x128xf32>
      %c0_126 = arith.constant 0 : index
      %c0_127 = arith.constant 0 : index
      %355 = vector.load %arg6[%c0_126, %c0_127] : memref<2x128xf32, #tpu.memory_space<vmem>>, vector<2x128xf32>
      tpu.vector_store %arg6[%c0_126, %c0_127], %354 {strides = array<i32>} : memref<2x128xf32, #tpu.memory_space<vmem>>, vector<2x128xf32>,
    } else {
    }
    %c0 = arith.constant 0 : index
    %c0_1 = arith.constant 0 : index
    %3 = vector.load %arg3[%c0, %c0_1] : memref<128x512xbf16, #tpu.memory_space<vmem>>, vector<128x512xbf16>
    %c0_2 = arith.constant 0 : index
    %c0_3 = arith.constant 0 : index
    %4 = vector.load %arg5[%c0_2, %c0_3] : memref<2x128xf32, #tpu.memory_space<vmem>>, vector<2x128xf32>
    %c0_4 = arith.constant 0 : index
    %c0_5 = arith.constant 0 : index
    %5 = vector.load %arg6[%c0_4, %c0_5] : memref<2x128xf32, #tpu.memory_space<vmem>>, vector<2x128xf32>
    %c0_i32_6 = arith.constant 0 : i32
    %6 = arith.index_cast %c0_i32_6 : i32 to index
    %c0_7 = arith.constant 0 : index
    %c0_8 = arith.constant 0 : index
    %7 = vector.load %arg2[%6, %c0_7, %c0_8] : memref<8x2x512xbf16, #tpu.memory_space<vmem>>, vector<1x2x512xbf16>
    %8 = vector.shape_cast %7 : vector<1x2x512xbf16> to vector<2x512xbf16>
    %9 = arith.extf %8 : vector<2x512xbf16> to vector<2x512xf32>
    %10 = arith.truncf %4 : vector<2x128xf32> to vector<2x128xbf16>
    %cst = arith.constant dense<0.000000e+00> : vector<2x512xf32>
    %11 = tpu.matmul %10, %3, %cst {dimension_numbers = #tpu.dot_dimension_numbers<[1], [0], [0], [1], [0, 0, 1, 1], [], []>} : vector<2x128xbf16>, vector<128x512xbf16>, vector<2x512xf32> -> vector<2x512xf32>
    %12 = arith.addf %9, %11 : vector<2x512xf32>
    %13 = vector.extract_strided_slice %12 {offsets = [0, 0], sizes = [2, 128], strides = [1, 1]} : vector<2x512xf32> to vector<2x128xf32>
    %cst_9 = arith.constant 5.000000e-01 : f32
    %14 = vector.broadcast %cst_9 : f32 to vector<2x128xf32>
    %15 = arith.mulf %14, %13 : vector<2x128xf32>
    %16 = math.tanh %15 : vector<2x128xf32>
    %cst_10 = arith.constant 5.000000e-01 : f32
    %17 = vector.broadcast %cst_10 : f32 to vector<2x128xf32>
    %18 = arith.mulf %17, %16 : vector<2x128xf32>
    %cst_11 = arith.constant 5.000000e-01 : f32
    %19 = vector.broadcast %cst_11 : f32 to vector<2x128xf32>
    %20 = arith.addf %18, %19 : vector<2x128xf32>
    %21 = vector.extract_strided_slice %12 {offsets = [0, 128], sizes = [2, 128], strides = [1, 1]} : vector<2x512xf32> to vector<2x128xf32>
    %cst_12 = arith.constant 5.000000e-01 : f32
    %22 = vector.broadcast %cst_12 : f32 to vector<2x128xf32>
    %23 = arith.mulf %22, %21 : vector<2x128xf32>
    %24 = math.tanh %23 : vector<2x128xf32>
    %cst_13 = arith.constant 5.000000e-01 : f32
    %25 = vector.broadcast %cst_13 : f32 to vector<2x128xf32>
    %26 = arith.mulf %25, %24 : vector<2x128xf32>
    %cst_14 = arith.constant 5.000000e-01 : f32
    %27 = vector.broadcast %cst_14 : f32 to vector<2x128xf32>
    %28 = arith.addf %26, %27 : vector<2x128xf32>
    %29 = vector.extract_strided_slice %12 {offsets = [0, 256], sizes = [2, 128], strides = [1, 1]} : vector<2x512xf32> to vector<2x128xf32>
    %30 = math.tanh %29 : vector<2x128xf32>
    %31 = vector.extract_strided_slice %12 {offsets = [0, 384], sizes = [2, 128], strides = [1, 1]} : vector<2x512xf32> to vector<2x128xf32>
    %cst_15 = arith.constant 5.000000e-01 : f32
    %32 = vector.broadcast %cst_15 : f32 to vector<2x128xf32>
    %33 = arith.mulf %32, %31 : vector<2x128xf32>
    %34 = math.tanh %33 : vector<2x128xf32>
    %cst_16 = arith.constant 5.000000e-01 : f32
    %35 = vector.broadcast %cst_16 : f32 to vector<2x128xf32>
    %36 = arith.mulf %35, %34 : vector<2x128xf32>
    %cst_17 = arith.constant 5.000000e-01 : f32
    %37 = vector.broadcast %cst_17 : f32 to vector<2x128xf32>
    %38 = arith.addf %36, %37 : vector<2x128xf32>
    %39 = arith.mulf %28, %5 : vector<2x128xf32>
    %40 = arith.mulf %20, %30 : vector<2x128xf32>
    %41 = arith.addf %39, %40 : vector<2x128xf32>
    %42 = math.tanh %41 : vector<2x128xf32>
    %43 = arith.mulf %38, %42 : vector<2x128xf32>
    %44 = arith.truncf %43 : vector<2x128xf32> to vector<2x128xbf16>
    %45 = arith.index_cast %c0_i32_6 : i32 to index
    %c0_18 = arith.constant 0 : index
    %c0_19 = arith.constant 0 : index
    %46 = vector.load %arg4[%45, %c0_18, %c0_19] : memref<8x2x128xbf16, #tpu.memory_space<vmem>>, vector<1x2x128xbf16>
    %47 = vector.shape_cast %46 : vector<1x2x128xbf16> to vector<2x128xbf16>
    %48 = vector.shape_cast %44 : vector<2x128xbf16> to vector<1x2x128xbf16>
    tpu.vector_store %arg4[%45, %c0_18, %c0_19], %48 {strides = array<i32>} : memref<8x2x128xbf16, #tpu.memory_space<vmem>>, vector<1x2x128xbf16>,
    %c1_i32 = arith.constant 1 : i32
    %49 = arith.index_cast %c1_i32 : i32 to index
    %c0_20 = arith.constant 0 : index
    %c0_21 = arith.constant 0 : index
    %50 = vector.load %arg2[%49, %c0_20, %c0_21] : memref<8x2x512xbf16, #tpu.memory_space<vmem>>, vector<1x2x512xbf16>
    %51 = vector.shape_cast %50 : vector<1x2x512xbf16> to vector<2x512xbf16>
    %52 = arith.extf %51 : vector<2x512xbf16> to vector<2x512xf32>
    %53 = arith.truncf %43 : vector<2x128xf32> to vector<2x128xbf16>
    %cst_22 = arith.constant dense<0.000000e+00> : vector<2x512xf32>
    %54 = tpu.matmul %53, %3, %cst_22 {dimension_numbers = #tpu.dot_dimension_numbers<[1], [0], [0], [1], [0, 0, 1, 1], [], []>} : vector<2x128xbf16>, vector<128x512xbf16>, vector<2x512xf32> -> vector<2x512xf32>
    %55 = arith.addf %52, %54 : vector<2x512xf32>
    %56 = vector.extract_strided_slice %55 {offsets = [0, 0], sizes = [2, 128], strides = [1, 1]} : vector<2x512xf32> to vector<2x128xf32>
    %cst_23 = arith.constant 5.000000e-01 : f32
    %57 = vector.broadcast %cst_23 : f32 to vector<2x128xf32>
    %58 = arith.mulf %57, %56 : vector<2x128xf32>
    %59 = math.tanh %58 : vector<2x128xf32>
    %cst_24 = arith.constant 5.000000e-01 : f32
    %60 = vector.broadcast %cst_24 : f32 to vector<2x128xf32>
    %61 = arith.mulf %60, %59 : vector<2x128xf32>
    %cst_25 = arith.constant 5.000000e-01 : f32
    %62 = vector.broadcast %cst_25 : f32 to vector<2x128xf32>
    %63 = arith.addf %61, %62 : vector<2x128xf32>
    %64 = vector.extract_strided_slice %55 {offsets = [0, 128], sizes = [2, 128], strides = [1, 1]} : vector<2x512xf32> to vector<2x128xf32>
    %cst_26 = arith.constant 5.000000e-01 : f32
    %65 = vector.broadcast %cst_26 : f32 to vector<2x128xf32>
    %66 = arith.mulf %65, %64 : vector<2x128xf32>
    %67 = math.tanh %66 : vector<2x128xf32>
    %cst_27 = arith.constant 5.000000e-01 : f32
    %68 = vector.broadcast %cst_27 : f32 to vector<2x128xf32>
    %69 = arith.mulf %68, %67 : vector<2x128xf32>
    %cst_28 = arith.constant 5.000000e-01 : f32
    %70 = vector.broadcast %cst_28 : f32 to vector<2x128xf32>
    %71 = arith.addf %69, %70 : vector<2x128xf32>
    %72 = vector.extract_strided_slice %55 {offsets = [0, 256], sizes = [2, 128], strides = [1, 1]} : vector<2x512xf32> to vector<2x128xf32>
    %73 = math.tanh %72 : vector<2x128xf32>
    %74 = vector.extract_strided_slice %55 {offsets = [0, 384], sizes = [2, 128], strides = [1, 1]} : vector<2x512xf32> to vector<2x128xf32>
    %cst_29 = arith.constant 5.000000e-01 : f32
    %75 = vector.broadcast %cst_29 : f32 to vector<2x128xf32>
    %76 = arith.mulf %75, %74 : vector<2x128xf32>
    %77 = math.tanh %76 : vector<2x128xf32>
    %cst_30 = arith.constant 5.000000e-01 : f32
    %78 = vector.broadcast %cst_30 : f32 to vector<2x128xf32>
    %79 = arith.mulf %78, %77 : vector<2x128xf32>
    %cst_31 = arith.constant 5.000000e-01 : f32
    %80 = vector.broadcast %cst_31 : f32 to vector<2x128xf32>
    %81 = arith.addf %79, %80 : vector<2x128xf32>
    %82 = arith.mulf %71, %41 : vector<2x128xf32>
    %83 = arith.mulf %63, %73 : vector<2x128xf32>
    %84 = arith.addf %82, %83 : vector<2x128xf32>
    %85 = math.tanh %84 : vector<2x128xf32>
    %86 = arith.mulf %81, %85 : vector<2x128xf32>
    %87 = arith.truncf %86 : vector<2x128xf32> to vector<2x128xbf16>
    %88 = arith.index_cast %c1_i32 : i32 to index
    %c0_32 = arith.constant 0 : index
    %c0_33 = arith.constant 0 : index
    %89 = vector.load %arg4[%88, %c0_32, %c0_33] : memref<8x2x128xbf16, #tpu.memory_space<vmem>>, vector<1x2x128xbf16>
    %90 = vector.shape_cast %89 : vector<1x2x128xbf16> to vector<2x128xbf16>
    %91 = vector.shape_cast %87 : vector<2x128xbf16> to vector<1x2x128xbf16>
    tpu.vector_store %arg4[%88, %c0_32, %c0_33], %91 {strides = array<i32>} : memref<8x2x128xbf16, #tpu.memory_space<vmem>>, vector<1x2x128xbf16>,
    %c2_i32 = arith.constant 2 : i32
    %92 = arith.index_cast %c2_i32 : i32 to index
    %c0_34 = arith.constant 0 : index
    %c0_35 = arith.constant 0 : index
    %93 = vector.load %arg2[%92, %c0_34, %c0_35] : memref<8x2x512xbf16, #tpu.memory_space<vmem>>, vector<1x2x512xbf16>
    %94 = vector.shape_cast %93 : vector<1x2x512xbf16> to vector<2x512xbf16>
    %95 = arith.extf %94 : vector<2x512xbf16> to vector<2x512xf32>
    %96 = arith.truncf %86 : vector<2x128xf32> to vector<2x128xbf16>
    %cst_36 = arith.constant dense<0.000000e+00> : vector<2x512xf32>
    %97 = tpu.matmul %96, %3, %cst_36 {dimension_numbers = #tpu.dot_dimension_numbers<[1], [0], [0], [1], [0, 0, 1, 1], [], []>} : vector<2x128xbf16>, vector<128x512xbf16>, vector<2x512xf32> -> vector<2x512xf32>
    %98 = arith.addf %95, %97 : vector<2x512xf32>
    %99 = vector.extract_strided_slice %98 {offsets = [0, 0], sizes = [2, 128], strides = [1, 1]} : vector<2x512xf32> to vector<2x128xf32>
    %cst_37 = arith.constant 5.000000e-01 : f32
    %100 = vector.broadcast %cst_37 : f32 to vector<2x128xf32>
    %101 = arith.mulf %100, %99 : vector<2x128xf32>
    %102 = math.tanh %101 : vector<2x128xf32>
    %cst_38 = arith.constant 5.000000e-01 : f32
    %103 = vector.broadcast %cst_38 : f32 to vector<2x128xf32>
    %104 = arith.mulf %103, %102 : vector<2x128xf32>
    %cst_39 = arith.constant 5.000000e-01 : f32
    %105 = vector.broadcast %cst_39 : f32 to vector<2x128xf32>
    %106 = arith.addf %104, %105 : vector<2x128xf32>
    %107 = vector.extract_strided_slice %98 {offsets = [0, 128], sizes = [2, 128], strides = [1, 1]} : vector<2x512xf32> to vector<2x128xf32>
    %cst_40 = arith.constant 5.000000e-01 : f32
    %108 = vector.broadcast %cst_40 : f32 to vector<2x128xf32>
    %109 = arith.mulf %108, %107 : vector<2x128xf32>
    %110 = math.tanh %109 : vector<2x128xf32>
    %cst_41 = arith.constant 5.000000e-01 : f32
    %111 = vector.broadcast %cst_41 : f32 to vector<2x128xf32>
    %112 = arith.mulf %111, %110 : vector<2x128xf32>
    %cst_42 = arith.constant 5.000000e-01 : f32
    %113 = vector.broadcast %cst_42 : f32 to vector<2x128xf32>
    %114 = arith.addf %112, %113 : vector<2x128xf32>
    %115 = vector.extract_strided_slice %98 {offsets = [0, 256], sizes = [2, 128], strides = [1, 1]} : vector<2x512xf32> to vector<2x128xf32>
    %116 = math.tanh %115 : vector<2x128xf32>
    %117 = vector.extract_strided_slice %98 {offsets = [0, 384], sizes = [2, 128], strides = [1, 1]} : vector<2x512xf32> to vector<2x128xf32>
    %cst_43 = arith.constant 5.000000e-01 : f32
    %118 = vector.broadcast %cst_43 : f32 to vector<2x128xf32>
    %119 = arith.mulf %118, %117 : vector<2x128xf32>
    %120 = math.tanh %119 : vector<2x128xf32>
    %cst_44 = arith.constant 5.000000e-01 : f32
    %121 = vector.broadcast %cst_44 : f32 to vector<2x128xf32>
    %122 = arith.mulf %121, %120 : vector<2x128xf32>
    %cst_45 = arith.constant 5.000000e-01 : f32
    %123 = vector.broadcast %cst_45 : f32 to vector<2x128xf32>
    %124 = arith.addf %122, %123 : vector<2x128xf32>
    %125 = arith.mulf %114, %84 : vector<2x128xf32>
    %126 = arith.mulf %106, %116 : vector<2x128xf32>
    %127 = arith.addf %125, %126 : vector<2x128xf32>
    %128 = math.tanh %127 : vector<2x128xf32>
    %129 = arith.mulf %124, %128 : vector<2x128xf32>
    %130 = arith.truncf %129 : vector<2x128xf32> to vector<2x128xbf16>
    %131 = arith.index_cast %c2_i32 : i32 to index
    %c0_46 = arith.constant 0 : index
    %c0_47 = arith.constant 0 : index
    %132 = vector.load %arg4[%131, %c0_46, %c0_47] : memref<8x2x128xbf16, #tpu.memory_space<vmem>>, vector<1x2x128xbf16>
    %133 = vector.shape_cast %132 : vector<1x2x128xbf16> to vector<2x128xbf16>
    %134 = vector.shape_cast %130 : vector<2x128xbf16> to vector<1x2x128xbf16>
    tpu.vector_store %arg4[%131, %c0_46, %c0_47], %134 {strides = array<i32>} : memref<8x2x128xbf16, #tpu.memory_space<vmem>>, vector<1x2x128xbf16>,
    %c3_i32 = arith.constant 3 : i32
    %135 = arith.index_cast %c3_i32 : i32 to index
    %c0_48 = arith.constant 0 : index
    %c0_49 = arith.constant 0 : index
    %136 = vector.load %arg2[%135, %c0_48, %c0_49] : memref<8x2x512xbf16, #tpu.memory_space<vmem>>, vector<1x2x512xbf16>
    %137 = vector.shape_cast %136 : vector<1x2x512xbf16> to vector<2x512xbf16>
    %138 = arith.extf %137 : vector<2x512xbf16> to vector<2x512xf32>
    %139 = arith.truncf %129 : vector<2x128xf32> to vector<2x128xbf16>
    %cst_50 = arith.constant dense<0.000000e+00> : vector<2x512xf32>
    %140 = tpu.matmul %139, %3, %cst_50 {dimension_numbers = #tpu.dot_dimension_numbers<[1], [0], [0], [1], [0, 0, 1, 1], [], []>} : vector<2x128xbf16>, vector<128x512xbf16>, vector<2x512xf32> -> vector<2x512xf32>
    %141 = arith.addf %138, %140 : vector<2x512xf32>
    %142 = vector.extract_strided_slice %141 {offsets = [0, 0], sizes = [2, 128], strides = [1, 1]} : vector<2x512xf32> to vector<2x128xf32>
    %cst_51 = arith.constant 5.000000e-01 : f32
    %143 = vector.broadcast %cst_51 : f32 to vector<2x128xf32>
    %144 = arith.mulf %143, %142 : vector<2x128xf32>
    %145 = math.tanh %144 : vector<2x128xf32>
    %cst_52 = arith.constant 5.000000e-01 : f32
    %146 = vector.broadcast %cst_52 : f32 to vector<2x128xf32>
    %147 = arith.mulf %146, %145 : vector<2x128xf32>
    %cst_53 = arith.constant 5.000000e-01 : f32
    %148 = vector.broadcast %cst_53 : f32 to vector<2x128xf32>
    %149 = arith.addf %147, %148 : vector<2x128xf32>
    %150 = vector.extract_strided_slice %141 {offsets = [0, 128], sizes = [2, 128], strides = [1, 1]} : vector<2x512xf32> to vector<2x128xf32>
    %cst_54 = arith.constant 5.000000e-01 : f32
    %151 = vector.broadcast %cst_54 : f32 to vector<2x128xf32>
    %152 = arith.mulf %151, %150 : vector<2x128xf32>
    %153 = math.tanh %152 : vector<2x128xf32>
    %cst_55 = arith.constant 5.000000e-01 : f32
    %154 = vector.broadcast %cst_55 : f32 to vector<2x128xf32>
    %155 = arith.mulf %154, %153 : vector<2x128xf32>
    %cst_56 = arith.constant 5.000000e-01 : f32
    %156 = vector.broadcast %cst_56 : f32 to vector<2x128xf32>
    %157 = arith.addf %155, %156 : vector<2x128xf32>
    %158 = vector.extract_strided_slice %141 {offsets = [0, 256], sizes = [2, 128], strides = [1, 1]} : vector<2x512xf32> to vector<2x128xf32>
    %159 = math.tanh %158 : vector<2x128xf32>
    %160 = vector.extract_strided_slice %141 {offsets = [0, 384], sizes = [2, 128], strides = [1, 1]} : vector<2x512xf32> to vector<2x128xf32>
    %cst_57 = arith.constant 5.000000e-01 : f32
    %161 = vector.broadcast %cst_57 : f32 to vector<2x128xf32>
    %162 = arith.mulf %161, %160 : vector<2x128xf32>
    %163 = math.tanh %162 : vector<2x128xf32>
    %cst_58 = arith.constant 5.000000e-01 : f32
    %164 = vector.broadcast %cst_58 : f32 to vector<2x128xf32>
    %165 = arith.mulf %164, %163 : vector<2x128xf32>
    %cst_59 = arith.constant 5.000000e-01 : f32
    %166 = vector.broadcast %cst_59 : f32 to vector<2x128xf32>
    %167 = arith.addf %165, %166 : vector<2x128xf32>
    %168 = arith.mulf %157, %127 : vector<2x128xf32>
    %169 = arith.mulf %149, %159 : vector<2x128xf32>
    %170 = arith.addf %168, %169 : vector<2x128xf32>
    %171 = math.tanh %170 : vector<2x128xf32>
    %172 = arith.mulf %167, %171 : vector<2x128xf32>
    %173 = arith.truncf %172 : vector<2x128xf32> to vector<2x128xbf16>
    %174 = arith.index_cast %c3_i32 : i32 to index
    %c0_60 = arith.constant 0 : index
    %c0_61 = arith.constant 0 : index
    %175 = vector.load %arg4[%174, %c0_60, %c0_61] : memref<8x2x128xbf16, #tpu.memory_space<vmem>>, vector<1x2x128xbf16>
    %176 = vector.shape_cast %175 : vector<1x2x128xbf16> to vector<2x128xbf16>
    %177 = vector.shape_cast %173 : vector<2x128xbf16> to vector<1x2x128xbf16>
    tpu.vector_store %arg4[%174, %c0_60, %c0_61], %177 {strides = array<i32>} : memref<8x2x128xbf16, #tpu.memory_space<vmem>>, vector<1x2x128xbf16>,
    %c4_i32 = arith.constant 4 : i32
    %178 = arith.index_cast %c4_i32 : i32 to index
    %c0_62 = arith.constant 0 : index
    %c0_63 = arith.constant 0 : index
    %179 = vector.load %arg2[%178, %c0_62, %c0_63] : memref<8x2x512xbf16, #tpu.memory_space<vmem>>, vector<1x2x512xbf16>
    %180 = vector.shape_cast %179 : vector<1x2x512xbf16> to vector<2x512xbf16>
    %181 = arith.extf %180 : vector<2x512xbf16> to vector<2x512xf32>
    %182 = arith.truncf %172 : vector<2x128xf32> to vector<2x128xbf16>
    %cst_64 = arith.constant dense<0.000000e+00> : vector<2x512xf32>
    %183 = tpu.matmul %182, %3, %cst_64 {dimension_numbers = #tpu.dot_dimension_numbers<[1], [0], [0], [1], [0, 0, 1, 1], [], []>} : vector<2x128xbf16>, vector<128x512xbf16>, vector<2x512xf32> -> vector<2x512xf32>
    %184 = arith.addf %181, %183 : vector<2x512xf32>
    %185 = vector.extract_strided_slice %184 {offsets = [0, 0], sizes = [2, 128], strides = [1, 1]} : vector<2x512xf32> to vector<2x128xf32>
    %cst_65 = arith.constant 5.000000e-01 : f32
    %186 = vector.broadcast %cst_65 : f32 to vector<2x128xf32>
    %187 = arith.mulf %186, %185 : vector<2x128xf32>
    %188 = math.tanh %187 : vector<2x128xf32>
    %cst_66 = arith.constant 5.000000e-01 : f32
    %189 = vector.broadcast %cst_66 : f32 to vector<2x128xf32>
    %190 = arith.mulf %189, %188 : vector<2x128xf32>
    %cst_67 = arith.constant 5.000000e-01 : f32
    %191 = vector.broadcast %cst_67 : f32 to vector<2x128xf32>
    %192 = arith.addf %190, %191 : vector<2x128xf32>
    %193 = vector.extract_strided_slice %184 {offsets = [0, 128], sizes = [2, 128], strides = [1, 1]} : vector<2x512xf32> to vector<2x128xf32>
    %cst_68 = arith.constant 5.000000e-01 : f32
    %194 = vector.broadcast %cst_68 : f32 to vector<2x128xf32>
    %195 = arith.mulf %194, %193 : vector<2x128xf32>
    %196 = math.tanh %195 : vector<2x128xf32>
    %cst_69 = arith.constant 5.000000e-01 : f32
    %197 = vector.broadcast %cst_69 : f32 to vector<2x128xf32>
    %198 = arith.mulf %197, %196 : vector<2x128xf32>
    %cst_70 = arith.constant 5.000000e-01 : f32
    %199 = vector.broadcast %cst_70 : f32 to vector<2x128xf32>
    %200 = arith.addf %198, %199 : vector<2x128xf32>
    %201 = vector.extract_strided_slice %184 {offsets = [0, 256], sizes = [2, 128], strides = [1, 1]} : vector<2x512xf32> to vector<2x128xf32>
    %202 = math.tanh %201 : vector<2x128xf32>
    %203 = vector.extract_strided_slice %184 {offsets = [0, 384], sizes = [2, 128], strides = [1, 1]} : vector<2x512xf32> to vector<2x128xf32>
    %cst_71 = arith.constant 5.000000e-01 : f32
    %204 = vector.broadcast %cst_71 : f32 to vector<2x128xf32>
    %205 = arith.mulf %204, %203 : vector<2x128xf32>
    %206 = math.tanh %205 : vector<2x128xf32>
    %cst_72 = arith.constant 5.000000e-01 : f32
    %207 = vector.broadcast %cst_72 : f32 to vector<2x128xf32>
    %208 = arith.mulf %207, %206 : vector<2x128xf32>
    %cst_73 = arith.constant 5.000000e-01 : f32
    %209 = vector.broadcast %cst_73 : f32 to vector<2x128xf32>
    %210 = arith.addf %208, %209 : vector<2x128xf32>
    %211 = arith.mulf %200, %170 : vector<2x128xf32>
    %212 = arith.mulf %192, %202 : vector<2x128xf32>
    %213 = arith.addf %211, %212 : vector<2x128xf32>
    %214 = math.tanh %213 : vector<2x128xf32>
    %215 = arith.mulf %210, %214 : vector<2x128xf32>
    %216 = arith.truncf %215 : vector<2x128xf32> to vector<2x128xbf16>
    %217 = arith.index_cast %c4_i32 : i32 to index
    %c0_74 = arith.constant 0 : index
    %c0_75 = arith.constant 0 : index
    %218 = vector.load %arg4[%217, %c0_74, %c0_75] : memref<8x2x128xbf16, #tpu.memory_space<vmem>>, vector<1x2x128xbf16>
    %219 = vector.shape_cast %218 : vector<1x2x128xbf16> to vector<2x128xbf16>
    %220 = vector.shape_cast %216 : vector<2x128xbf16> to vector<1x2x128xbf16>
    tpu.vector_store %arg4[%217, %c0_74, %c0_75], %220 {strides = array<i32>} : memref<8x2x128xbf16, #tpu.memory_space<vmem>>, vector<1x2x128xbf16>,
    %c5_i32 = arith.constant 5 : i32
    %221 = arith.index_cast %c5_i32 : i32 to index
    %c0_76 = arith.constant 0 : index
    %c0_77 = arith.constant 0 : index
    %222 = vector.load %arg2[%221, %c0_76, %c0_77] : memref<8x2x512xbf16, #tpu.memory_space<vmem>>, vector<1x2x512xbf16>
    %223 = vector.shape_cast %222 : vector<1x2x512xbf16> to vector<2x512xbf16>
    %224 = arith.extf %223 : vector<2x512xbf16> to vector<2x512xf32>
    %225 = arith.truncf %215 : vector<2x128xf32> to vector<2x128xbf16>
    %cst_78 = arith.constant dense<0.000000e+00> : vector<2x512xf32>
    %226 = tpu.matmul %225, %3, %cst_78 {dimension_numbers = #tpu.dot_dimension_numbers<[1], [0], [0], [1], [0, 0, 1, 1], [], []>} : vector<2x128xbf16>, vector<128x512xbf16>, vector<2x512xf32> -> vector<2x512xf32>
    %227 = arith.addf %224, %226 : vector<2x512xf32>
    %228 = vector.extract_strided_slice %227 {offsets = [0, 0], sizes = [2, 128], strides = [1, 1]} : vector<2x512xf32> to vector<2x128xf32>
    %cst_79 = arith.constant 5.000000e-01 : f32
    %229 = vector.broadcast %cst_79 : f32 to vector<2x128xf32>
    %230 = arith.mulf %229, %228 : vector<2x128xf32>
    %231 = math.tanh %230 : vector<2x128xf32>
    %cst_80 = arith.constant 5.000000e-01 : f32
    %232 = vector.broadcast %cst_80 : f32 to vector<2x128xf32>
    %233 = arith.mulf %232, %231 : vector<2x128xf32>
    %cst_81 = arith.constant 5.000000e-01 : f32
    %234 = vector.broadcast %cst_81 : f32 to vector<2x128xf32>
    %235 = arith.addf %233, %234 : vector<2x128xf32>
    %236 = vector.extract_strided_slice %227 {offsets = [0, 128], sizes = [2, 128], strides = [1, 1]} : vector<2x512xf32> to vector<2x128xf32>
    %cst_82 = arith.constant 5.000000e-01 : f32
    %237 = vector.broadcast %cst_82 : f32 to vector<2x128xf32>
    %238 = arith.mulf %237, %236 : vector<2x128xf32>
    %239 = math.tanh %238 : vector<2x128xf32>
    %cst_83 = arith.constant 5.000000e-01 : f32
    %240 = vector.broadcast %cst_83 : f32 to vector<2x128xf32>
    %241 = arith.mulf %240, %239 : vector<2x128xf32>
    %cst_84 = arith.constant 5.000000e-01 : f32
    %242 = vector.broadcast %cst_84 : f32 to vector<2x128xf32>
    %243 = arith.addf %241, %242 : vector<2x128xf32>
    %244 = vector.extract_strided_slice %227 {offsets = [0, 256], sizes = [2, 128], strides = [1, 1]} : vector<2x512xf32> to vector<2x128xf32>
    %245 = math.tanh %244 : vector<2x128xf32>
    %246 = vector.extract_strided_slice %227 {offsets = [0, 384], sizes = [2, 128], strides = [1, 1]} : vector<2x512xf32> to vector<2x128xf32>
    %cst_85 = arith.constant 5.000000e-01 : f32
    %247 = vector.broadcast %cst_85 : f32 to vector<2x128xf32>
    %248 = arith.mulf %247, %246 : vector<2x128xf32>
    %249 = math.tanh %248 : vector<2x128xf32>
    %cst_86 = arith.constant 5.000000e-01 : f32
    %250 = vector.broadcast %cst_86 : f32 to vector<2x128xf32>
    %251 = arith.mulf %250, %249 : vector<2x128xf32>
    %cst_87 = arith.constant 5.000000e-01 : f32
    %252 = vector.broadcast %cst_87 : f32 to vector<2x128xf32>
    %253 = arith.addf %251, %252 : vector<2x128xf32>
    %254 = arith.mulf %243, %213 : vector<2x128xf32>
    %255 = arith.mulf %235, %245 : vector<2x128xf32>
    %256 = arith.addf %254, %255 : vector<2x128xf32>
    %257 = math.tanh %256 : vector<2x128xf32>
    %258 = arith.mulf %253, %257 : vector<2x128xf32>
    %259 = arith.truncf %258 : vector<2x128xf32> to vector<2x128xbf16>
    %260 = arith.index_cast %c5_i32 : i32 to index
    %c0_88 = arith.constant 0 : index
    %c0_89 = arith.constant 0 : index
    %261 = vector.load %arg4[%260, %c0_88, %c0_89] : memref<8x2x128xbf16, #tpu.memory_space<vmem>>, vector<1x2x128xbf16>
    %262 = vector.shape_cast %261 : vector<1x2x128xbf16> to vector<2x128xbf16>
    %263 = vector.shape_cast %259 : vector<2x128xbf16> to vector<1x2x128xbf16>
    tpu.vector_store %arg4[%260, %c0_88, %c0_89], %263 {strides = array<i32>} : memref<8x2x128xbf16, #tpu.memory_space<vmem>>, vector<1x2x128xbf16>,
    %c6_i32 = arith.constant 6 : i32
    %264 = arith.index_cast %c6_i32 : i32 to index
    %c0_90 = arith.constant 0 : index
    %c0_91 = arith.constant 0 : index
    %265 = vector.load %arg2[%264, %c0_90, %c0_91] : memref<8x2x512xbf16, #tpu.memory_space<vmem>>, vector<1x2x512xbf16>
    %266 = vector.shape_cast %265 : vector<1x2x512xbf16> to vector<2x512xbf16>
    %267 = arith.extf %266 : vector<2x512xbf16> to vector<2x512xf32>
    %268 = arith.truncf %258 : vector<2x128xf32> to vector<2x128xbf16>
    %cst_92 = arith.constant dense<0.000000e+00> : vector<2x512xf32>
    %269 = tpu.matmul %268, %3, %cst_92 {dimension_numbers = #tpu.dot_dimension_numbers<[1], [0], [0], [1], [0, 0, 1, 1], [], []>} : vector<2x128xbf16>, vector<128x512xbf16>, vector<2x512xf32> -> vector<2x512xf32>
    %270 = arith.addf %267, %269 : vector<2x512xf32>
    %271 = vector.extract_strided_slice %270 {offsets = [0, 0], sizes = [2, 128], strides = [1, 1]} : vector<2x512xf32> to vector<2x128xf32>
    %cst_93 = arith.constant 5.000000e-01 : f32
    %272 = vector.broadcast %cst_93 : f32 to vector<2x128xf32>
    %273 = arith.mulf %272, %271 : vector<2x128xf32>
    %274 = math.tanh %273 : vector<2x128xf32>
    %cst_94 = arith.constant 5.000000e-01 : f32
    %275 = vector.broadcast %cst_94 : f32 to vector<2x128xf32>
    %276 = arith.mulf %275, %274 : vector<2x128xf32>
    %cst_95 = arith.constant 5.000000e-01 : f32
    %277 = vector.broadcast %cst_95 : f32 to vector<2x128xf32>
    %278 = arith.addf %276, %277 : vector<2x128xf32>
    %279 = vector.extract_strided_slice %270 {offsets = [0, 128], sizes = [2, 128], strides = [1, 1]} : vector<2x512xf32> to vector<2x128xf32>
    %cst_96 = arith.constant 5.000000e-01 : f32
    %280 = vector.broadcast %cst_96 : f32 to vector<2x128xf32>
    %281 = arith.mulf %280, %279 : vector<2x128xf32>
    %282 = math.tanh %281 : vector<2x128xf32>
    %cst_97 = arith.constant 5.000000e-01 : f32
    %283 = vector.broadcast %cst_97 : f32 to vector<2x128xf32>
    %284 = arith.mulf %283, %282 : vector<2x128xf32>
    %cst_98 = arith.constant 5.000000e-01 : f32
    %285 = vector.broadcast %cst_98 : f32 to vector<2x128xf32>
    %286 = arith.addf %284, %285 : vector<2x128xf32>
    %287 = vector.extract_strided_slice %270 {offsets = [0, 256], sizes = [2, 128], strides = [1, 1]} : vector<2x512xf32> to vector<2x128xf32>
    %288 = math.tanh %287 : vector<2x128xf32>
    %289 = vector.extract_strided_slice %270 {offsets = [0, 384], sizes = [2, 128], strides = [1, 1]} : vector<2x512xf32> to vector<2x128xf32>
    %cst_99 = arith.constant 5.000000e-01 : f32
    %290 = vector.broadcast %cst_99 : f32 to vector<2x128xf32>
    %291 = arith.mulf %290, %289 : vector<2x128xf32>
    %292 = math.tanh %291 : vector<2x128xf32>
    %cst_100 = arith.constant 5.000000e-01 : f32
    %293 = vector.broadcast %cst_100 : f32 to vector<2x128xf32>
    %294 = arith.mulf %293, %292 : vector<2x128xf32>
    %cst_101 = arith.constant 5.000000e-01 : f32
    %295 = vector.broadcast %cst_101 : f32 to vector<2x128xf32>
    %296 = arith.addf %294, %295 : vector<2x128xf32>
    %297 = arith.mulf %286, %256 : vector<2x128xf32>
    %298 = arith.mulf %278, %288 : vector<2x128xf32>
    %299 = arith.addf %297, %298 : vector<2x128xf32>
    %300 = math.tanh %299 : vector<2x128xf32>
    %301 = arith.mulf %296, %300 : vector<2x128xf32>
    %302 = arith.truncf %301 : vector<2x128xf32> to vector<2x128xbf16>
    %303 = arith.index_cast %c6_i32 : i32 to index
    %c0_102 = arith.constant 0 : index
    %c0_103 = arith.constant 0 : index
    %304 = vector.load %arg4[%303, %c0_102, %c0_103] : memref<8x2x128xbf16, #tpu.memory_space<vmem>>, vector<1x2x128xbf16>
    %305 = vector.shape_cast %304 : vector<1x2x128xbf16> to vector<2x128xbf16>
    %306 = vector.shape_cast %302 : vector<2x128xbf16> to vector<1x2x128xbf16>
    tpu.vector_store %arg4[%303, %c0_102, %c0_103], %306 {strides = array<i32>} : memref<8x2x128xbf16, #tpu.memory_space<vmem>>, vector<1x2x128xbf16>,
    %c7_i32 = arith.constant 7 : i32
    %307 = arith.index_cast %c7_i32 : i32 to index
    %c0_104 = arith.constant 0 : index
    %c0_105 = arith.constant 0 : index
    %308 = vector.load %arg2[%307, %c0_104, %c0_105] : memref<8x2x512xbf16, #tpu.memory_space<vmem>>, vector<1x2x512xbf16>
    %309 = vector.shape_cast %308 : vector<1x2x512xbf16> to vector<2x512xbf16>
    %310 = arith.extf %309 : vector<2x512xbf16> to vector<2x512xf32>
    %311 = arith.truncf %301 : vector<2x128xf32> to vector<2x128xbf16>
    %cst_106 = arith.constant dense<0.000000e+00> : vector<2x512xf32>
    %312 = tpu.matmul %311, %3, %cst_106 {dimension_numbers = #tpu.dot_dimension_numbers<[1], [0], [0], [1], [0, 0, 1, 1], [], []>} : vector<2x128xbf16>, vector<128x512xbf16>, vector<2x512xf32> -> vector<2x512xf32>
    %313 = arith.addf %310, %312 : vector<2x512xf32>
    %314 = vector.extract_strided_slice %313 {offsets = [0, 0], sizes = [2, 128], strides = [1, 1]} : vector<2x512xf32> to vector<2x128xf32>
    %cst_107 = arith.constant 5.000000e-01 : f32
    %315 = vector.broadcast %cst_107 : f32 to vector<2x128xf32>
    %316 = arith.mulf %315, %314 : vector<2x128xf32>
    %317 = math.tanh %316 : vector<2x128xf32>
    %cst_108 = arith.constant 5.000000e-01 : f32
    %318 = vector.broadcast %cst_108 : f32 to vector<2x128xf32>
    %319 = arith.mulf %318, %317 : vector<2x128xf32>
    %cst_109 = arith.constant 5.000000e-01 : f32
    %320 = vector.broadcast %cst_109 : f32 to vector<2x128xf32>
    %321 = arith.addf %319, %320 : vector<2x128xf32>
    %322 = vector.extract_strided_slice %313 {offsets = [0, 128], sizes = [2, 128], strides = [1, 1]} : vector<2x512xf32> to vector<2x128xf32>
    %cst_110 = arith.constant 5.000000e-01 : f32
    %323 = vector.broadcast %cst_110 : f32 to vector<2x128xf32>
    %324 = arith.mulf %323, %322 : vector<2x128xf32>
    %325 = math.tanh %324 : vector<2x128xf32>
    %cst_111 = arith.constant 5.000000e-01 : f32
    %326 = vector.broadcast %cst_111 : f32 to vector<2x128xf32>
    %327 = arith.mulf %326, %325 : vector<2x128xf32>
    %cst_112 = arith.constant 5.000000e-01 : f32
    %328 = vector.broadcast %cst_112 : f32 to vector<2x128xf32>
    %329 = arith.addf %327, %328 : vector<2x128xf32>
    %330 = vector.extract_strided_slice %313 {offsets = [0, 256], sizes = [2, 128], strides = [1, 1]} : vector<2x512xf32> to vector<2x128xf32>
    %331 = math.tanh %330 : vector<2x128xf32>
    %332 = vector.extract_strided_slice %313 {offsets = [0, 384], sizes = [2, 128], strides = [1, 1]} : vector<2x512xf32> to vector<2x128xf32>
    %cst_113 = arith.constant 5.000000e-01 : f32
    %333 = vector.broadcast %cst_113 : f32 to vector<2x128xf32>
    %334 = arith.mulf %333, %332 : vector<2x128xf32>
    %335 = math.tanh %334 : vector<2x128xf32>
    %cst_114 = arith.constant 5.000000e-01 : f32
    %336 = vector.broadcast %cst_114 : f32 to vector<2x128xf32>
    %337 = arith.mulf %336, %335 : vector<2x128xf32>
    %cst_115 = arith.constant 5.000000e-01 : f32
    %338 = vector.broadcast %cst_115 : f32 to vector<2x128xf32>
    %339 = arith.addf %337, %338 : vector<2x128xf32>
    %340 = arith.mulf %329, %299 : vector<2x128xf32>
    %341 = arith.mulf %321, %331 : vector<2x128xf32>
    %342 = arith.addf %340, %341 : vector<2x128xf32>
    %343 = math.tanh %342 : vector<2x128xf32>
    %344 = arith.mulf %339, %343 : vector<2x128xf32>
    %345 = arith.truncf %344 : vector<2x128xf32> to vector<2x128xbf16>
    %346 = arith.index_cast %c7_i32 : i32 to index
    %c0_116 = arith.constant 0 : index
    %c0_117 = arith.constant 0 : index
    %347 = vector.load %arg4[%346, %c0_116, %c0_117] : memref<8x2x128xbf16, #tpu.memory_space<vmem>>, vector<1x2x128xbf16>
    %348 = vector.shape_cast %347 : vector<1x2x128xbf16> to vector<2x128xbf16>
    %349 = vector.shape_cast %345 : vector<2x128xbf16> to vector<1x2x128xbf16>
    tpu.vector_store %arg4[%346, %c0_116, %c0_117], %349 {strides = array<i32>} : memref<8x2x128xbf16, #tpu.memory_space<vmem>>, vector<1x2x128xbf16>,
    %c8_i32 = arith.constant 8 : i32
    %c0_118 = arith.constant 0 : index
    %c0_119 = arith.constant 0 : index
    %350 = vector.load %arg5[%c0_118, %c0_119] : memref<2x128xf32, #tpu.memory_space<vmem>>, vector<2x128xf32>
    tpu.vector_store %arg5[%c0_118, %c0_119], %344 {strides = array<i32>} : memref<2x128xf32, #tpu.memory_space<vmem>>, vector<2x128xf32>,
    %c0_120 = arith.constant 0 : index
    %c0_121 = arith.constant 0 : index
    %351 = vector.load %arg6[%c0_120, %c0_121] : memref<2x128xf32, #tpu.memory_space<vmem>>, vector<2x128xf32>
    tpu.vector_store %arg6[%c0_120, %c0_121], %342 {strides = array<i32>} : memref<2x128xf32, #tpu.memory_space<vmem>>, vector<2x128xf32>,
    return
  }
  func.func @transform_0(%arg0: i32, %arg1: i32) -> (i32, i32, i32) {
    %c0_i32 = arith.constant 0 : i32
    %c0_i32_0 = arith.constant 0 : i32
    return %arg1, %arg0, %c0_i32 : i32, i32, i32
  }
  func.func @transform_1(%arg0: i32, %arg1: i32) -> (i32, i32) {
    %c0_i32 = arith.constant 0 : i32
    %c0_i32_0 = arith.constant 0 : i32
    %c0_i32_1 = arith.constant 0 : i32
    return %c0_i32, %c0_i32_0 : i32, i32
  }
  func.func @transform_2(%arg0: i32, %arg1: i32) -> (i32, i32, i32) {
    %c0_i32 = arith.constant 0 : i32
    %c0_i32_0 = arith.constant 0 : i32
    return %arg1, %arg0, %c0_i32 : i32, i32, i32
  }
}

module attributes {stable_mosaic.version = 11 : i64} {
  func.func @_linear_kernel(%arg0: i32, %arg1: i32, %arg2: memref<16x128xbf16, #tpu.memory_space<vmem>>, %arg3: memref<128x128xbf16, #tpu.memory_space<vmem>>, %arg4: memref<1x128xf32, #tpu.memory_space<vmem>>, %arg5: memref<16x128xf32, #tpu.memory_space<vmem>>) attributes {dimension_semantics = [#tpu.dimension_semantics<parallel>, #tpu.dimension_semantics<parallel>], iteration_bounds = array<i64: 1, 1>, scalar_prefetch = 0 : i64, scratch_operands = 0 : i64, tpu.core_type = #tpu.core_type<tc>, window_params = [{transform_indices = @transform_0, window_bounds = array<i64: 16, 128>}, {pipeline_mode = #tpu.pipeline_mode<synchronous>, transform_indices = @transform_1, window_bounds = array<i64: 128, 128>}, {pipeline_mode = #tpu.pipeline_mode<synchronous>, transform_indices = @transform_2, window_bounds = array<i64: 1, 128>}, {transform_indices = @transform_3, window_bounds = array<i64: 16, 128>}]} {
    %c0 = arith.constant 0 : index
    %c0_0 = arith.constant 0 : index
    %0 = vector.load %arg2[%c0, %c0_0] : memref<16x128xbf16, #tpu.memory_space<vmem>>, vector<16x128xbf16>
    %c0_1 = arith.constant 0 : index
    %c0_2 = arith.constant 0 : index
    %1 = vector.load %arg3[%c0_1, %c0_2] : memref<128x128xbf16, #tpu.memory_space<vmem>>, vector<128x128xbf16>
    %cst = arith.constant dense<0.000000e+00> : vector<16x128xf32>
    %2 = tpu.matmul %0, %1, %cst {dimension_numbers = #tpu.dot_dimension_numbers<[1], [0], [0], [1], [0, 0, 1, 1], [], []>} : vector<16x128xbf16>, vector<128x128xbf16>, vector<16x128xf32> -> vector<16x128xf32>
    %c0_3 = arith.constant 0 : index
    %c0_4 = arith.constant 0 : index
    %3 = vector.load %arg4[%c0_3, %c0_4] : memref<1x128xf32, #tpu.memory_space<vmem>>, vector<1x128xf32>
    %4 = vector.broadcast %3 : vector<1x128xf32> to vector<16x128xf32>
    %5 = arith.addf %2, %4 : vector<16x128xf32>
    %c0_5 = arith.constant 0 : index
    %c0_6 = arith.constant 0 : index
    %6 = vector.load %arg5[%c0_5, %c0_6] : memref<16x128xf32, #tpu.memory_space<vmem>>, vector<16x128xf32>
    tpu.vector_store %arg5[%c0_5, %c0_6], %5 {strides = array<i32>} : memref<16x128xf32, #tpu.memory_space<vmem>>, vector<16x128xf32>,
    return
  }
  func.func @transform_0(%arg0: i32, %arg1: i32) -> (i32, i32) {
    %c0_i32 = arith.constant 0 : i32
    %c0_i32_0 = arith.constant 0 : i32
    return %arg0, %c0_i32 : i32, i32
  }
  func.func @transform_1(%arg0: i32, %arg1: i32) -> (i32, i32) {
    %c0_i32 = arith.constant 0 : i32
    %c0_i32_0 = arith.constant 0 : i32
    return %c0_i32, %arg1 : i32, i32
  }
  func.func @transform_2(%arg0: i32, %arg1: i32) -> (i32, i32) {
    %c0_i32 = arith.constant 0 : i32
    %c0_i32_0 = arith.constant 0 : i32
    return %c0_i32, %arg1 : i32, i32
  }
  func.func @transform_3(%arg0: i32, %arg1: i32) -> (i32, i32) {
    %c0_i32 = arith.constant 0 : i32
    return %arg0, %arg1 : i32, i32
  }
}

</mosaic_0001>

<llo_original>
// kernel: _lambda_.5
$region0: #{_lambda_.5}
  #allocation0 [shape = 'u32[]', space=smem, size = 0x4, offset = 0x4, fixed_abs, tag = 'smem constant byte address 0x4 - core index']
  #allocation1 [shape = 'u32[72,128]{1,0:T(1,128)}', space=vmem, size = 0x9000, scoped, tag = 'internal scratch']
  %s0 = inlined_call_operand.vmem [shape: bf16[16,128], index: 0, kind: input, shape index: {}]
  %s1 = inlined_call_operand.vmem [shape: bf16[128,128], index: 1, kind: input, shape index: {}]
  %s2 = inlined_call_operand.vmem [shape: f32[1,128], index: 2, kind: input, shape index: {}]
  %s3 = inlined_call_operand.hbm [shape: f32[16,128], index: 3, kind: output, shape index: {}]
  %s4 = sld [smem:[#allocation0]]
  $region22: #{_lambda_.5} parent=0
    _
  %s6 = ssub.s32 1, %s4
  %s7 = scalar_select 0, %s6, %s4
  $region1: #{_lambda_.5} parent=0
    #allocation2 [shape = 'u8[8192]{0}', space=vmem, size = 0x2000, scoped, tag = 'output window, operand 0, single buffered']
    #allocation3 [shape = 's32[1]{0}', space=sflag, size = 0x4, scoped, tag = 'scoped memory for _lambda_.5']
    %8 = vsyncpa [#allocation3], 0
    // Predicated region
    $region2: #{_lambda_.5} parent=1 // pred_check
      _
    $region3: #{_lambda_.5} parent=1 // pred_check_branch
      %10 = sbr.rel (0) target = $region5
    $region4: #{_lambda_.5} parent=1 // pred_region
      _
    $region5: #{_lambda_.5} parent=1 // pred_fallthru
      _
    // Predicated region
    $region6: #{_lambda_.5} parent=1 // pred_check
      _
    $region7: #{_lambda_.5} parent=1 // pred_check_branch
      %12 = sbr.rel (0) target = $region9
    $region8: #{_lambda_.5} parent=1 // pred_region
      _
    $region9: #{_lambda_.5} parent=1 // pred_fallthru
      _
    // Predicated region
    $region10: #{_lambda_.5} parent=1 // pred_check
      _
    $region11: #{_lambda_.5} parent=1 // pred_check_branch
      %14 = sbr.rel (0) target = $region13
    $region12: #{_lambda_.5} parent=1 // pred_region
      _
    $region13: #{_lambda_.5} parent=1 // pred_fallthru
      _
    %v15 = vld [vmem:[%s0] sm:$0xf]
    %v16 = vld [vmem:[%s0 + $0x4] sm:$0xf]
    %v17 = vld [vmem:[%s1] sm:$0xf]
    %v18 = vld [vmem:[%s1 + $0x4] sm:$0xf]
    %v19 = vld [vmem:[%s1 + $0x8] sm:$0xf]
    %v20 = vld [vmem:[%s1 + $0xc] sm:$0xf]
    %v21 = vld [vmem:[%s1 + $0x10] sm:$0xf]
    %v22 = vld [vmem:[%s1 + $0x14] sm:$0xf]
    %v23 = vld [vmem:[%s1 + $0x18] sm:$0xf]
    %v24 = vld [vmem:[%s1 + $0x1c] sm:$0xf]
    %v25 = vld [vmem:[%s1 + $0x20] sm:$0xf]
    %v26 = vld [vmem:[%s1 + $0x24] sm:$0xf]
    %v27 = vld [vmem:[%s1 + $0x28] sm:$0xf]
    %v28 = vld [vmem:[%s1 + $0x2c] sm:$0xf]
    %v29 = vld [vmem:[%s1 + $0x30] sm:$0xf]
    %v30 = vld [vmem:[%s1 + $0x34] sm:$0xf]
    %v31 = vld [vmem:[%s1 + $0x38] sm:$0xf]
    %v32 = vld [vmem:[%s1 + $0x3c] sm:$0xf]
    %v33 = vld [vmem:[%s2] sm:$0x1]
    %v35 = vperm.slane %v33, 0
    %v39 = vunpack.c.l.b16 %v15
    %v40 = vunpack.c.l.b16 %v16
    %v41 = vpack.c.b16 %v40, %v39
    %v59 = vunpack.c.l.b16 %v17
    %v60 = vunpack.c.l.b16 %v18
    %v61 = vunpack.c.l.b16 %v19
    %v62 = vunpack.c.l.b16 %v20
    %v63 = vunpack.c.l.b16 %v21
    %v64 = vunpack.c.l.b16 %v22
    %v65 = vunpack.c.l.b16 %v23
    %v66 = vunpack.c.l.b16 %v24
    %v67 = vunpack.c.l.b16 %v25
    %v68 = vunpack.c.l.b16 %v26
    %v69 = vunpack.c.l.b16 %v27
    %v70 = vunpack.c.l.b16 %v28
    %v71 = vunpack.c.l.b16 %v29
    %v72 = vunpack.c.l.b16 %v30
    %v73 = vunpack.c.l.b16 %v31
    %v74 = vunpack.c.l.b16 %v32
    %v75 = vpack.c.b16 %v60, %v59
    %v76 = vpack.c.b16 %v62, %v61
    %v77 = vpack.c.b16 %v64, %v63
    %v78 = vpack.c.b16 %v66, %v65
    %v79 = vpack.c.b16 %v68, %v67
    %v80 = vpack.c.b16 %v70, %v69
    %v81 = vpack.c.b16 %v72, %v71
    %v82 = vpack.c.b16 %v74, %v73
    %91 = vmatpush.bf16.msra.mxu0 %v82
    %92 = vmatpush.bf16.msra.mxu0 %v81
    %93 = vmatpush.bf16.msra.mxu0 %v80
    %94 = vmatpush.bf16.msra.mxu0 %v79
    %95 = vmatpush.bf16.msra.mxu0 %v78
    %96 = vmatpush.bf16.msra.mxu0 %v77
    %97 = vmatpush.bf16.msra.mxu0 %v76
    %98 = vmatpush.bf16.msra.mxu0 %v75
    %99 = vmatmul.bf16.gmra.mxu0 %v41
    %v100 = vpop.f32.mrf.mxu0
    %v101 = vadd.f32 %v35, %v100
    %v102 = vpop.f32.mrf.mxu0
    %v103 = vadd.f32 %v35, %v102
    %104 = vdwg.mxu0
    %105 = vst [vmem:[#allocation2] sm:$0xff] %v101
    %106 = vst [vmem:[#allocation2 + $0x8] sm:$0xff] %v103
    // Predicated region
    $region14: #{_lambda_.5} parent=1 // pred_check
      _
    $region15: #{_lambda_.5} parent=1 // pred_check_branch
      %108 = sbr.rel (0) target = $region17
    $region16: #{_lambda_.5} parent=1 // pred_region
      %110 = vsyncadd [#allocation3], 0
      %s111 = sshll.u32 [#allocation2], 4
      %s112 = int_to_ptr.vmem [resolvable:$true] %s111
      %s113 = sshll.u32 %s3, 4
      %s114 = int_to_ptr.hbm [resolvable:$true] %s113
      %119 = dma.vmem_to_hbm [thread:$0]  %s112, 256, %s114, [#allocation3], 128, 128, 8
    $region17: #{_lambda_.5} parent=1 // pred_fallthru
      _
    // Predicated region
    $region18: #{_lambda_.5} parent=1 // pred_check
      _
    $region19: #{_lambda_.5} parent=1 // pred_check_branch
      %121 = sbr.rel (0) target = $region21
    $region20: #{_lambda_.5} parent=1 // pred_region
      %123 = dma.done [#allocation3], 256
    $region21: #{_lambda_.5} parent=1 // pred_fallthru
      _
    %124 = vsyncpa [#allocation3], 1

// kernel: _lambda_.3
$region0: #{_lambda_.3}
  #allocation0 [shape = 'u32[]', space=smem, size = 0x4, offset = 0x4, fixed_abs, tag = 'smem constant byte address 0x4 - core index']
  #allocation1 [shape = 'u32[72,128]{1,0:T(1,128)}', space=vmem, size = 0x9000, scoped, tag = 'internal scratch']
  %s0 = inlined_call_operand.vmem [shape: f32[16,32], index: 0, kind: input, shape index: {}]
  %s1 = inlined_call_operand.vmem [shape: bf16[32,512], index: 1, kind: input, shape index: {}]
  %s2 = inlined_call_operand.vmem [shape: f32[1,512], index: 2, kind: input, shape index: {}]
  %s3 = inlined_call_operand.vmem [shape: bf16[16,512], index: 3, kind: output, shape index: {}]
  %s4 = sld [smem:[#allocation0]]
  $region117: #{_lambda_.3} parent=0
    _
  %s6 = ssub.s32 1, %s4
  %s7 = scalar_select 0, %s6, %s4
  $region1: #{_lambda_.3} parent=0
    #allocation2 [shape = 'u8[32768]{0}', space=vmem, size = 0x8000, scoped, tag = 'input window, operand 1']
    #allocation3 [shape = 'u8[16384]{0}', space=vmem, size = 0x4000, scoped, tag = 'output window, operand 0']
    loop: start=0, step=1, limit=4
    $region2: #{_lambda_.3} parent=1 // loop_pre_header
      _
    $region3: #{_lambda_.3} parent=1 // loop_header
      %s9 = sphi 0, %s13
      %p10 = scmp.ge.s32.totalorder %s9, 4
      %s16 = sphi 0, %s28
      %s17 = sphi 0, %s24
      %s18 = sphi 0, %s16
      %s19 = sphi 0, %s17
      %s20 = sphi 0, %s18
      %s21 = sphi 0, %s19
      %s31 = sphi 0, %s33
      %s34 = sphi 0, %s31
      %s35 = sphi 0, %s34
      %s51 = sphi 0, %s35
      %s57 = sphi 0, %s59
      %s60 = sphi 0, %s57
      %s61 = sphi 0, %s60
      %s77 = sphi 0, %s61
      %s83 = sphi 0, %s85
      %s86 = sphi 0, %s83
      %s87 = sphi 0, %s86
      %s103 = sphi 0, %s87
      %s111 = sphi 0, %s113
      %s114 = sphi 0, %s111
      %s115 = sphi 0, %s114
      %s131 = sphi 0, %s115
    $region4: #{_lambda_.3} parent=1 // loop_header_branch
      %12 = sbr.rel (%p10) target = $region8
    $region5: #{_lambda_.3} parent=1 // loop_body
      %s14 = ssub.s32 %s9, 1
      %s15 = ssub.s32 %s9, 2
      %s22 = sadd.s32 1, %s17
      %p23 = scmp.ge.s32.totalorder %s22, 2
      %s24 = scalar_select %p23, 0, %s22
      %s25 = sadd.s32 1, %s16
      %s26 = scalar_select %p23, %s25, %s16
      %p27 = scmp.ge.s32.totalorder %s26, 1
      %s28 = scalar_select %p27, 0, %s26
      %s29 = ssub.s32 %s16, %s28
      %p30 = scmp.eq.s32.totalorder %s29, 0
      %s32 = sadd.s32 %s31, 1
      %s33 = scalar_select %p30, %s31, %s32
      %p36 = pneg %p30
      %p37 = scmp.eq.s32.totalorder %s9, 1
      %p38 = por %p36, %p37
      %p39 = scmp.ne.s32.totalorder %s31, %s34
      %p40 = scmp.eq.s32.totalorder %s9, 0
      %p41 = por %p39, %p40
      %p42 = scmp.ne.s32.totalorder %s31, %s34
      %p43 = scmp.eq.s32.totalorder %s14, 1
      %p44 = por %p42, %p43
      %p45 = scmp.ne.s32.totalorder %s34, %s35
      %p46 = scmp.eq.s32.totalorder %s14, 0
      %p47 = por %p45, %p46
      %p48 = scmp.ne.s32.totalorder %s34, %s35
      %p49 = scmp.eq.s32.totalorder %s15, 1
      %p50 = por %p48, %p49
      %p52 = scmp.ne.s32.totalorder %s35, %s51
      %p53 = scmp.eq.s32.totalorder %s15, 0
      %p54 = por %p52, %p53
      %s55 = ssub.s32 %s17, %s24
      %p56 = scmp.eq.s32.totalorder %s55, 0
      %s58 = sadd.s32 %s57, 1
      %s59 = scalar_select %p56, %s57, %s58
      %p62 = pneg %p56
      %p63 = scmp.eq.s32.totalorder %s9, 1
      %p64 = por %p62, %p63
      %p65 = scmp.ne.s32.totalorder %s57, %s60
      %p66 = scmp.eq.s32.totalorder %s9, 0
      %p67 = por %p65, %p66
      %p68 = scmp.ne.s32.totalorder %s57, %s60
      %p69 = scmp.eq.s32.totalorder %s14, 1
      %p70 = por %p68, %p69
      %p71 = scmp.ne.s32.totalorder %s60, %s61
      %p72 = scmp.eq.s32.totalorder %s14, 0
      %p73 = por %p71, %p72
      %p74 = scmp.ne.s32.totalorder %s60, %s61
      %p75 = scmp.eq.s32.totalorder %s15, 1
      %p76 = por %p74, %p75
      %p78 = scmp.ne.s32.totalorder %s61, %s77
      %p79 = scmp.eq.s32.totalorder %s15, 0
      %p80 = por %p78, %p79
      %s81 = ssub.s32 %s17, %s24
      %p82 = scmp.eq.s32.totalorder %s81, 0
      %s84 = sadd.s32 %s83, 1
      %s85 = scalar_select %p82, %s83, %s84
      %p88 = pneg %p82
      %p89 = scmp.eq.s32.totalorder %s9, 1
      %p90 = por %p88, %p89
      %p91 = scmp.ne.s32.totalorder %s83, %s86
      %p92 = scmp.eq.s32.totalorder %s9, 0
      %p93 = por %p91, %p92
      %p94 = scmp.ne.s32.totalorder %s83, %s86
      %p95 = scmp.eq.s32.totalorder %s14, 1
      %p96 = por %p94, %p95
      %p97 = scmp.ne.s32.totalorder %s86, %s87
      %p98 = scmp.eq.s32.totalorder %s14, 0
      %p99 = por %p97, %p98
      %p100 = scmp.ne.s32.totalorder %s86, %s87
      %p101 = scmp.eq.s32.totalorder %s15, 1
      %p102 = por %p100, %p101
      %p104 = scmp.ne.s32.totalorder %s87, %s103
      %p105 = scmp.eq.s32.totalorder %s15, 0
      %p106 = por %p104, %p105
      %s107 = ssub.s32 %s16, %s28
      %s108 = ssub.s32 %s17, %s24
      %s109 = sor.u32 %s107, %s108
      %p110 = scmp.eq.s32.totalorder %s109, 0
      %s112 = sadd.s32 %s111, 1
      %s113 = scalar_select %p110, %s111, %s112
      %p116 = pneg %p110
      %p117 = scmp.eq.s32.totalorder %s9, 1
      %p118 = por %p116, %p117
      %p119 = scmp.ne.s32.totalorder %s111, %s114
      %p120 = scmp.eq.s32.totalorder %s9, 0
      %p121 = por %p119, %p120
      %p122 = scmp.ne.s32.totalorder %s111, %s114
      %p123 = scmp.eq.s32.totalorder %s14, 1
      %p124 = por %p122, %p123
      %p125 = scmp.ne.s32.totalorder %s114, %s115
      %p126 = scmp.eq.s32.totalorder %s14, 0
      %p127 = por %p125, %p126
      %p128 = scmp.ne.s32.totalorder %s114, %s115
      %p129 = scmp.eq.s32.totalorder %s15, 1
      %p130 = por %p128, %p129
      %p132 = scmp.ne.s32.totalorder %s115, %s131
      %p133 = scmp.eq.s32.totalorder %s15, 0
      %p134 = por %p132, %p133
      %p135 = scmp.le.s32.totalorder 1, %s9
      %p136 = scmp.lt.s32.totalorder %s9, 3
      %p137 = pnand %p135, %p136
      %p138 = pneg %p137
      // Predicated region
      $region9: #{_lambda_.3} parent=5 // pred_check
        _
      $region10: #{_lambda_.3} parent=5 // pred_check_branch
        %140 = sbr.rel (%p137) target = $region12
      $region11: #{_lambda_.3} parent=5 // pred_region
        %s141 = ssub.s32 %s9, 1
        // Predicated region
        $region13: #{_lambda_.3} parent=11 // pred_check
          %p142 = pneg %p47
        $region14: #{_lambda_.3} parent=11 // pred_check_branch
          %144 = sbr.rel (%p142) target = $region16
        $region15: #{_lambda_.3} parent=11 // pred_region
          %s145 = smul.u32 2, %s18
          %p146 = scmp.lt.s32.totalorder %s145, 1
          %s147 = scalar_select %p146, %s145, 1
          %s148 = smul.addr %s147, 8
          %s149 = scalar_lea.vmem %s0, %s148
          %s150 = smul.u32 2, %s18
        $region16: #{_lambda_.3} parent=11 // pred_fallthru
          _
      $region12: #{_lambda_.3} parent=5 // pred_fallthru
        _
      %p151 = scmp.lt.s32.totalorder %s9, 2
      // Predicated region
      $region17: #{_lambda_.3} parent=5 // pred_check
        %p152 = pneg %p151
      $region18: #{_lambda_.3} parent=5 // pred_check_branch
        %154 = sbr.rel (%p152) target = $region20
      $region19: #{_lambda_.3} parent=5 // pred_region
        // Predicated region
        $region21: #{_lambda_.3} parent=19 // pred_check
          %p155 = pneg %p67
        $region22: #{_lambda_.3} parent=19 // pred_check_branch
          %157 = sbr.rel (%p155) target = $region24
        $region23: #{_lambda_.3} parent=19 // pred_region
          %s158 = sand.u32 %s57, 1
          %s159 = sand.u32 %s57, 1
          %s160 = smul.addr %s159, 32
          %s161 = scalar_lea.vmem [#allocation2], %s160
          %s162 = smul.u32 2, %s17
          %s163 = smul.addr %s162, 4
          %s164 = scalar_lea.vmem %s1, %s163
          // Predicated region
          $region25: #{_lambda_.3} parent=23 // pred_check
            _
          $region26: #{_lambda_.3} parent=23 // pred_check_branch
            %166 = sbr.rel (0) target = $region28
          $region27: #{_lambda_.3} parent=23 // pred_region
            // Predicated region
            $region29: #{_lambda_.3} parent=27 // pred_check
              _
            $region30: #{_lambda_.3} parent=27 // pred_check_branch
              %168 = sbr.rel (0) target = $region32
            $region31: #{_lambda_.3} parent=27 // pred_region
              // Predicated region
              $region44: #{_lambda_.3} parent=31 // pred_check
                _
              $region45: #{_lambda_.3} parent=31 // pred_check_branch
                %190 = sbr.rel (0) target = $region47
              $region46: #{_lambda_.3} parent=31 // pred_region
                loop: start=0, step=1, limit=1
                $region48: #{_lambda_.3} parent=46 // loop_pre_header
                  _
                $region49: #{_lambda_.3} parent=46 // loop_header
                  %s192 = sphi 0, %s196
                  %p193 = scmp.ge.s32.totalorder %s192, 1
                  %s197 = sphi %s164, %s164
                  %s198 = sphi %s161, %s161
                $region50: #{_lambda_.3} parent=46 // loop_header_branch
                  %195 = sbr.rel (%p193) target = $region54
                $region51: #{_lambda_.3} parent=46 // loop_body
                  %v199 = vld [vmem:[%s197] sm:$0xff]
                  %200 = vst [vmem:[%s198] sm:$0xff] %v199
                  %v201 = vld [vmem:[%s197 + $0x10] sm:$0xff]
                  %202 = vst [vmem:[%s198 + $0x8] sm:$0xff] %v201
                  %v203 = vld [vmem:[%s197 + $0x20] sm:$0xff]
                  %204 = vst [vmem:[%s198 + $0x10] sm:$0xff] %v203
                  %v205 = vld [vmem:[%s197 + $0x30] sm:$0xff]
                  %206 = vst [vmem:[%s198 + $0x18] sm:$0xff] %v205
                $region52: #{_lambda_.3} parent=46 // loop_footer
                  %s196 = sadd.s32 1, %s192
                $region53: #{_lambda_.3} parent=46 // loop_footer_branch
                  %191 = sbr.rel target = $region49
                $region54: #{_lambda_.3} parent=46 // loop_exit
                  _
              $region47: #{_lambda_.3} parent=31 // pred_fallthru
                _
              // Predicated region
              $region55: #{_lambda_.3} parent=31 // pred_check
                _
              $region56: #{_lambda_.3} parent=31 // pred_check_branch
                %208 = sbr.rel target = $region58
              $region57: #{_lambda_.3} parent=31 // pred_region
                _
              $region58: #{_lambda_.3} parent=31 // pred_fallthru
                _
            $region32: #{_lambda_.3} parent=27 // pred_fallthru
              _
            // Predicated region
            $region33: #{_lambda_.3} parent=27 // pred_check
              _
            $region34: #{_lambda_.3} parent=27 // pred_check_branch
              %170 = sbr.rel target = $region36
            $region35: #{_lambda_.3} parent=27 // pred_region
              %s172 = ssub.s32 256, 1
              loop: start=0, step=1, limit=1
              $region37: #{_lambda_.3} parent=35 // loop_pre_header
                _
              $region38: #{_lambda_.3} parent=35 // loop_header
                %s174 = sphi 0, %s178
                %p175 = scmp.ge.s32.totalorder %s174, 1
                %s179 = sphi %s164, %s164
                %s180 = sphi %s161, %s161
              $region39: #{_lambda_.3} parent=35 // loop_header_branch
                %177 = sbr.rel (%p175) target = $region43
              $region40: #{_lambda_.3} parent=35 // loop_body
                %v181 = vld [vmem:[%s179] sm:%s172]
                %182 = vst [vmem:[%s180] sm:%s172] %v181
                %v183 = vld [vmem:[%s179 + $0x10] sm:%s172]
                %184 = vst [vmem:[%s180 + $0x8] sm:%s172] %v183
                %v185 = vld [vmem:[%s179 + $0x20] sm:%s172]
                %186 = vst [vmem:[%s180 + $0x10] sm:%s172] %v185
                %v187 = vld [vmem:[%s179 + $0x30] sm:%s172]
                %188 = vst [vmem:[%s180 + $0x18] sm:%s172] %v187
              $region41: #{_lambda_.3} parent=35 // loop_footer
                %s178 = sadd.s32 1, %s174
              $region42: #{_lambda_.3} parent=35 // loop_footer_branch
                %173 = sbr.rel target = $region38
              $region43: #{_lambda_.3} parent=35 // loop_exit
                _
            $region36: #{_lambda_.3} parent=27 // pred_fallthru
              _
          $region28: #{_lambda_.3} parent=23 // pred_fallthru
            _
          %209 = vnop
        $region24: #{_lambda_.3} parent=19 // pred_fallthru
          _
        // Predicated region
        $region59: #{_lambda_.3} parent=19 // pred_check
          %p210 = pneg %p93
        $region60: #{_lambda_.3} parent=19 // pred_check_branch
          %212 = sbr.rel (%p210) target = $region62
        $region61: #{_lambda_.3} parent=19 // pred_region
          %s213 = smul.u32 2, %s17
          %p214 = scmp.lt.s32.totalorder %s213, 3
          %s215 = scalar_select %p214, %s213, 3
          %s216 = scalar_lea.vmem %s2, %s215
          %s217 = smul.u32 2, %s17
        $region62: #{_lambda_.3} parent=19 // pred_fallthru
          _
      $region20: #{_lambda_.3} parent=5 // pred_fallthru
        _
      %p218 = scmp.le.s32.totalorder 1, %s9
      %p219 = scmp.lt.s32.totalorder %s9, 3
      %p220 = pnand %p218, %p219
      %p221 = pneg %p220
      // Predicated region
      $region63: #{_lambda_.3} parent=5 // pred_check
        _
      $region64: #{_lambda_.3} parent=5 // pred_check_branch
        %223 = sbr.rel (%p220) target = $region66
      $region65: #{_lambda_.3} parent=5 // pred_region
        %s224 = ssub.s32 %s9, 1
        %s225 = sand.u32 %s60, 1
        %s226 = sand.u32 %s60, 1
        %s227 = smul.addr %s226, 32
        %s228 = scalar_lea.vmem [#allocation2], %s227
        // Predicated region
        $region67: #{_lambda_.3} parent=65 // pred_check
          %p229 = pneg %p73
        $region68: #{_lambda_.3} parent=65 // pred_check_branch
          %231 = sbr.rel (%p229) target = $region70
        $region69: #{_lambda_.3} parent=65 // pred_region
          _
        $region70: #{_lambda_.3} parent=65 // pred_fallthru
          _
        %s232 = smul.u32 2, %s18
        %p233 = scmp.lt.s32.totalorder %s232, 1
        %s234 = scalar_select %p233, %s232, 1
        %s235 = smul.addr %s234, 8
        %s236 = scalar_lea.vmem %s0, %s235
        %p237 = pneg %p47
        %p238 = pneg %p44
        %s239 = sand.u32 %s60, 1
        %s240 = sand.u32 %s60, 1
        %s241 = smul.addr %s240, 32
        %s242 = scalar_lea.vmem [#allocation2], %s241
        %p243 = pneg %p73
        %p244 = pneg %p70
        %s245 = smul.u32 2, %s19
        %p246 = scmp.lt.s32.totalorder %s245, 3
        %s247 = scalar_select %p246, %s245, 3
        %s248 = scalar_lea.vmem %s2, %s247
        %p249 = pneg %p99
        %p250 = pneg %p96
        %p251 = pneg %p127
        %p252 = pneg %p124
        %s253 = sand.u32 %s114, 1
        %s254 = sand.u32 %s114, 1
        %s255 = smul.addr %s254, 16
        %s256 = scalar_lea.vmem [#allocation3], %s255
        %s257 = smul.u32 2, %s18
        %p258 = scmp.lt.s32.totalorder %s257, 1
        %s259 = scalar_select %p258, %s257, 1
        %s260 = smul.addr %s259, 8
        %s261 = scalar_lea.vmem %s0, %s260
        %s262 = smul.u32 2, %s18
        %s263 = smul.u32 2, %s19
        %s264 = smul.u32 2, %s19
        %p265 = scmp.lt.s32.totalorder %s264, 3
        %s266 = scalar_select %p265, %s264, 3
        %s267 = scalar_lea.vmem %s2, %s266
        %s268 = smul.u32 2, %s19
        %s269 = smul.u32 2, %s18
        %s270 = smul.u32 2, %s19
        %v272 = vld [vmem:[%s261] sm:$0xff]
        %v273 = vld [vmem:[%s261 + $0x8] sm:$0xff]
        %v274 = vpack.c.bf16 %v273, %v272
        %v275 = vld [vmem:[%s228] sm:$0xff]
        %v276 = vld [vmem:[%s228 + $0x8] sm:$0xff]
        %v277 = vld [vmem:[%s228 + $0x10] sm:$0xff]
        %v278 = vld [vmem:[%s228 + $0x18] sm:$0xff]
        %v279 = vld [vmem:[%s267] sm:$0x3]
        %v281 = vperm.slane %v279, 0
        %v282 = vperm.slane %v279, 1
        %v289 = vunpack.c.l.b16 %v275
        %v290 = vunpack.c.h.b16 %v275
        %v291 = vunpack.c.l.b16 %v276
        %v292 = vunpack.c.h.b16 %v276
        %v293 = vunpack.c.l.b16 %v277
        %v294 = vunpack.c.h.b16 %v277
        %v295 = vunpack.c.l.b16 %v278
        %v296 = vunpack.c.h.b16 %v278
        %v297 = vpack.c.b16 %v291, %v289
        %v298 = vpack.c.b16 %v292, %v290
        %v299 = vpack.c.b16 %v295, %v293
        %v300 = vpack.c.b16 %v296, %v294
        %vm305 = vcmask 261120
        %v307 = vsel %vm305, %v274, 0
        %309 = vmatpush.bf16.msra.mxu0 0
        %310 = vmatpush.bf16.msra.mxu0 0
        %311 = vmatpush.bf16.msra.mxu0 0
        %312 = vmatpush.bf16.msra.mxu0 0
        %313 = vmatpush.bf16.msra.mxu0 0
        %314 = vmatpush.bf16.msra.mxu0 0
        %315 = vmatpush.bf16.msra.mxu0 %v299
        %316 = vmatpush.bf16.msra.mxu0 %v297
        %317 = vmatmul.bf16.gmra.mxu0 %v307
        %v318 = vpop.f32.mrf.mxu0
        %v319 = vadd.f32 %v281, %v318
        %v320 = vpop.f32.mrf.mxu0
        %v321 = vadd.f32 %v281, %v320
        %322 = vdwg.mxu0
        %323 = vmatpush.bf16.msra.mxu0 0
        %324 = vmatpush.bf16.msra.mxu0 0
        %325 = vmatpush.bf16.msra.mxu0 0
        %326 = vmatpush.bf16.msra.mxu0 0
        %327 = vmatpush.bf16.msra.mxu0 0
        %328 = vmatpush.bf16.msra.mxu0 0
        %329 = vmatpush.bf16.msra.mxu0 %v300
        %330 = vmatpush.bf16.msra.mxu0 %v298
        %331 = vmatmul.bf16.gmra.mxu0 %v307
        %v332 = vpop.f32.mrf.mxu0
        %v333 = vadd.f32 %v282, %v332
        %v334 = vpop.f32.mrf.mxu0
        %v335 = vadd.f32 %v282, %v334
        %336 = vdwg.mxu0
        %v337 = vpack.c.bf16 %v333, %v319
        %v338 = vpack.c.bf16 %v335, %v321
        %339 = vst [vmem:[%s256] sm:$0xff] %v337
        %340 = vst [vmem:[%s256 + $0x8] sm:$0xff] %v338
        %s341 = sand.u32 %s114, 1
        %s342 = sand.u32 %s114, 1
        %s343 = smul.addr %s342, 16
        %s344 = scalar_lea.vmem [#allocation3], %s343
        // Predicated region
        $region71: #{_lambda_.3} parent=65 // pred_check
          %p345 = pneg %p124
        $region72: #{_lambda_.3} parent=65 // pred_check_branch
          %347 = sbr.rel (%p345) target = $region74
        $region73: #{_lambda_.3} parent=65 // pred_region
          %s348 = smul.u32 2, %s18
          %s349 = smul.u32 2, %s19
          %s350 = smul.addr %s348, 4
          %s351 = sadd.s32 %s349, %s350
          %s352 = smul.addr %s351, 4
          %s353 = scalar_lea.vmem %s3, %s352
          // Predicated region
          $region75: #{_lambda_.3} parent=73 // pred_check
            _
          $region76: #{_lambda_.3} parent=73 // pred_check_branch
            %355 = sbr.rel (0) target = $region78
          $region77: #{_lambda_.3} parent=73 // pred_region
            // Predicated region
            $region79: #{_lambda_.3} parent=77 // pred_check
              _
            $region80: #{_lambda_.3} parent=77 // pred_check_branch
              %357 = sbr.rel (0) target = $region82
            $region81: #{_lambda_.3} parent=77 // pred_region
              // Predicated region
              $region94: #{_lambda_.3} parent=81 // pred_check
                _
              $region95: #{_lambda_.3} parent=81 // pred_check_branch
                %375 = sbr.rel (0) target = $region97
              $region96: #{_lambda_.3} parent=81 // pred_region
                loop: start=0, step=1, limit=1
                $region98: #{_lambda_.3} parent=96 // loop_pre_header
                  _
                $region99: #{_lambda_.3} parent=96 // loop_header
                  %s377 = sphi 0, %s381
                  %p378 = scmp.ge.s32.totalorder %s377, 1
                  %s382 = sphi %s344, %s344
                  %s383 = sphi %s353, %s353
                $region100: #{_lambda_.3} parent=96 // loop_header_branch
                  %380 = sbr.rel (%p378) target = $region104
                $region101: #{_lambda_.3} parent=96 // loop_body
                  %v384 = vld [vmem:[%s382] sm:$0xff]
                  %385 = vst [vmem:[%s383] sm:$0xff] %v384
                  %v386 = vld [vmem:[%s382 + $0x8] sm:$0xff]
                  %387 = vst [vmem:[%s383 + $0x10] sm:$0xff] %v386
                $region102: #{_lambda_.3} parent=96 // loop_footer
                  %s381 = sadd.s32 1, %s377
                $region103: #{_lambda_.3} parent=96 // loop_footer_branch
                  %376 = sbr.rel target = $region99
                $region104: #{_lambda_.3} parent=96 // loop_exit
                  _
              $region97: #{_lambda_.3} parent=81 // pred_fallthru
                _
              // Predicated region
              $region105: #{_lambda_.3} parent=81 // pred_check
                _
              $region106: #{_lambda_.3} parent=81 // pred_check_branch
                %389 = sbr.rel target = $region108
              $region107: #{_lambda_.3} parent=81 // pred_region
                _
              $region108: #{_lambda_.3} parent=81 // pred_fallthru
                _
            $region82: #{_lambda_.3} parent=77 // pred_fallthru
              _
            // Predicated region
            $region83: #{_lambda_.3} parent=77 // pred_check
              _
            $region84: #{_lambda_.3} parent=77 // pred_check_branch
              %359 = sbr.rel target = $region86
            $region85: #{_lambda_.3} parent=77 // pred_region
              %s361 = ssub.s32 256, 1
              loop: start=0, step=1, limit=1
              $region87: #{_lambda_.3} parent=85 // loop_pre_header
                _
              $region88: #{_lambda_.3} parent=85 // loop_header
                %s363 = sphi 0, %s367
                %p364 = scmp.ge.s32.totalorder %s363, 1
                %s368 = sphi %s344, %s344
                %s369 = sphi %s353, %s353
              $region89: #{_lambda_.3} parent=85 // loop_header_branch
                %366 = sbr.rel (%p364) target = $region93
              $region90: #{_lambda_.3} parent=85 // loop_body
                %v370 = vld [vmem:[%s368] sm:%s361]
                %371 = vst [vmem:[%s369] sm:%s361] %v370
                %v372 = vld [vmem:[%s368 + $0x8] sm:%s361]
                %373 = vst [vmem:[%s369 + $0x10] sm:%s361] %v372
              $region91: #{_lambda_.3} parent=85 // loop_footer
                %s367 = sadd.s32 1, %s363
              $region92: #{_lambda_.3} parent=85 // loop_footer_branch
                %362 = sbr.rel target = $region88
              $region93: #{_lambda_.3} parent=85 // loop_exit
                _
            $region86: #{_lambda_.3} parent=77 // pred_fallthru
              _
          $region78: #{_lambda_.3} parent=73 // pred_fallthru
            _
          %390 = vnop
        $region74: #{_lambda_.3} parent=65 // pred_fallthru
          _
      $region66: #{_lambda_.3} parent=5 // pred_fallthru
        _
      %p391 = scmp.le.s32.totalorder 2, %s9
      // Predicated region
      $region109: #{_lambda_.3} parent=5 // pred_check
        %p392 = pneg %p391
      $region110: #{_lambda_.3} parent=5 // pred_check_branch
        %394 = sbr.rel (%p392) target = $region112
      $region111: #{_lambda_.3} parent=5 // pred_region
        %s395 = ssub.s32 %s9, 2
        // Predicated region
        $region113: #{_lambda_.3} parent=111 // pred_check
          %p396 = pneg %p130
        $region114: #{_lambda_.3} parent=111 // pred_check_branch
          %398 = sbr.rel (%p396) target = $region116
        $region115: #{_lambda_.3} parent=111 // pred_region
          %s399 = sand.u32 %s115, 1
          %s400 = sand.u32 %s115, 1
          %s401 = smul.addr %s400, 16
          %s402 = scalar_lea.vmem [#allocation3], %s401
        $region116: #{_lambda_.3} parent=111 // pred_fallthru
          _
      $region112: #{_lambda_.3} parent=5 // pred_fallthru
        _
    $region6: #{_lambda_.3} parent=1 // loop_footer
      %s13 = sadd.s32 1, %s9
    $region7: #{_lambda_.3} parent=1 // loop_footer_branch
      %8 = sbr.rel target = $region3
    $region8: #{_lambda_.3} parent=1 // loop_exit
      _

// kernel: _lambda_.4
$region0: #{_lambda_.4}
  #allocation0 [shape = 'u32[]', space=smem, size = 0x4, offset = 0x4, fixed_abs, tag = 'smem constant byte address 0x4 - core index']
  #allocation1 [shape = 'u32[72,128]{1,0:T(1,128)}', space=vmem, size = 0x9000, scoped, tag = 'internal scratch']
  #allocation2 [shape = 'f32[2,128]{1,0:T(2,128)}', space=vmem, size = 0x400, scoped, tag = 'scratch operand']
  #allocation3 [shape = 'f32[2,128]{1,0:T(2,128)}', space=vmem, size = 0x400, scoped, tag = 'scratch operand']
  %s0 = inlined_call_operand.vmem [shape: bf16[8,2,512], index: 0, kind: input, shape index: {}]
  %s1 = inlined_call_operand.vmem [shape: bf16[128,512], index: 1, kind: input, shape index: {}]
  %s2 = inlined_call_operand.vmem [shape: bf16[8,2,128], index: 2, kind: output, shape index: {}]
  %s3 = sld [smem:[#allocation0]]
  $region22: #{_lambda_.4} parent=0
    _
  %s5 = ssub.s32 1, %s3
  %s6 = scalar_select 0, %s5, %s3
  // Predicated region
  $region2: #{_lambda_.4} parent=0 // pred_check
    _
  $region3: #{_lambda_.4} parent=0 // pred_check_branch
    %8 = sbr.rel (0) target = $region5
  $region4: #{_lambda_.4} parent=0 // pred_region
    _
  $region5: #{_lambda_.4} parent=0 // pred_fallthru
    _
  // Predicated region
  $region6: #{_lambda_.4} parent=0 // pred_check
    _
  $region7: #{_lambda_.4} parent=0 // pred_check_branch
    %10 = sbr.rel (0) target = $region9
  $region8: #{_lambda_.4} parent=0 // pred_region
    _
  $region9: #{_lambda_.4} parent=0 // pred_fallthru
    _
  %p11 = scmp.eq.s32.totalorder 0, 0
  // Predicated region
  $region10: #{_lambda_.4} parent=0 // pred_check
    %p12 = pneg %p11
  $region11: #{_lambda_.4} parent=0 // pred_check_branch
    %14 = sbr.rel (%p12) target = $region13
  $region12: #{_lambda_.4} parent=0 // pred_region
    %15 = vst [vmem:[#allocation2] sm:$0x3] 0.0
    %16 = vst [vmem:[#allocation3] sm:$0x3] 0.0
  $region13: #{_lambda_.4} parent=0 // pred_fallthru
    _
  %v17 = vld [vmem:[%s1] sm:$0xff]
  %v18 = vld [vmem:[%s1 + $0x8] sm:$0xff]
  %v19 = vld [vmem:[%s1 + $0x10] sm:$0xff]
  %v20 = vld [vmem:[%s1 + $0x18] sm:$0xff]
  %v21 = vld [vmem:[%s1 + $0x20] sm:$0xff]
  %v22 = vld [vmem:[%s1 + $0x28] sm:$0xff]
  %v23 = vld [vmem:[%s1 + $0x30] sm:$0xff]
  %v24 = vld [vmem:[%s1 + $0x38] sm:$0xff]
  %v25 = vld [vmem:[%s1 + $0x40] sm:$0xff]
  %v26 = vld [vmem:[%s1 + $0x48] sm:$0xff]
  %v27 = vld [vmem:[%s1 + $0x50] sm:$0xff]
  %v28 = vld [vmem:[%s1 + $0x58] sm:$0xff]
  %v29 = vld [vmem:[%s1 + $0x60] sm:$0xff]
  %v30 = vld [vmem:[%s1 + $0x68] sm:$0xff]
  %v31 = vld [vmem:[%s1 + $0x70] sm:$0xff]
  %v32 = vld [vmem:[%s1 + $0x78] sm:$0xff]
  %v33 = vld [vmem:[%s1 + $0x80] sm:$0xff]
  %v34 = vld [vmem:[%s1 + $0x88] sm:$0xff]
  %v35 = vld [vmem:[%s1 + $0x90] sm:$0xff]
  %v36 = vld [vmem:[%s1 + $0x98] sm:$0xff]
  %v37 = vld [vmem:[%s1 + $0xa0] sm:$0xff]
  %v38 = vld [vmem:[%s1 + $0xa8] sm:$0xff]
  %v39 = vld [vmem:[%s1 + $0xb0] sm:$0xff]
  %v40 = vld [vmem:[%s1 + $0xb8] sm:$0xff]
  %v41 = vld [vmem:[%s1 + $0xc0] sm:$0xff]
  %v42 = vld [vmem:[%s1 + $0xc8] sm:$0xff]
  %v43 = vld [vmem:[%s1 + $0xd0] sm:$0xff]
  %v44 = vld [vmem:[%s1 + $0xd8] sm:$0xff]
  %v45 = vld [vmem:[%s1 + $0xe0] sm:$0xff]
  %v46 = vld [vmem:[%s1 + $0xe8] sm:$0xff]
  %v47 = vld [vmem:[%s1 + $0xf0] sm:$0xff]
  %v48 = vld [vmem:[%s1 + $0xf8] sm:$0xff]
  %v49 = vld [vmem:[#allocation2] sm:$0x3]
  %v50 = vld [vmem:[#allocation3] sm:$0x3]
  %v51 = vld [vmem:[%s0] sm:$0xf]
  %v52 = vunpack.c.l.bf16 %v51
  %v53 = vpack.c.bf16 %v49, %v49
  %v86 = vunpack.c.l.b16 %v17
  %v87 = vunpack.c.h.b16 %v17
  %v88 = vunpack.c.l.b16 %v18
  %v89 = vunpack.c.h.b16 %v18
  %v90 = vunpack.c.l.b16 %v19
  %v91 = vunpack.c.h.b16 %v19
  %v92 = vunpack.c.l.b16 %v20
  %v93 = vunpack.c.h.b16 %v20
  %v94 = vunpack.c.l.b16 %v21
  %v95 = vunpack.c.h.b16 %v21
  %v96 = vunpack.c.l.b16 %v22
  %v97 = vunpack.c.h.b16 %v22
  %v98 = vunpack.c.l.b16 %v23
  %v99 = vunpack.c.h.b16 %v23
  %v100 = vunpack.c.l.b16 %v24
  %v101 = vunpack.c.h.b16 %v24
  %v102 = vunpack.c.l.b16 %v25
  %v103 = vunpack.c.h.b16 %v25
  %v104 = vunpack.c.l.b16 %v26
  %v105 = vunpack.c.h.b16 %v26
  %v106 = vunpack.c.l.b16 %v27
  %v107 = vunpack.c.h.b16 %v27
  %v108 = vunpack.c.l.b16 %v28
  %v109 = vunpack.c.h.b16 %v28
  %v110 = vunpack.c.l.b16 %v29
  %v111 = vunpack.c.h.b16 %v29
  %v112 = vunpack.c.l.b16 %v30
  %v113 = vunpack.c.h.b16 %v30
  %v114 = vunpack.c.l.b16 %v31
  %v115 = vunpack.c.h.b16 %v31
  %v116 = vunpack.c.l.b16 %v32
  %v117 = vunpack.c.h.b16 %v32
  %v118 = vunpack.c.l.b16 %v33
  %v119 = vunpack.c.h.b16 %v33
  %v120 = vunpack.c.l.b16 %v34
  %v121 = vunpack.c.h.b16 %v34
  %v122 = vunpack.c.l.b16 %v35
  %v123 = vunpack.c.h.b16 %v35
  %v124 = vunpack.c.l.b16 %v36
  %v125 = vunpack.c.h.b16 %v36
  %v126 = vunpack.c.l.b16 %v37
  %v127 = vunpack.c.h.b16 %v37
  %v128 = vunpack.c.l.b16 %v38
  %v129 = vunpack.c.h.b16 %v38
  %v130 = vunpack.c.l.b16 %v39
  %v131 = vunpack.c.h.b16 %v39
  %v132 = vunpack.c.l.b16 %v40
  %v133 = vunpack.c.h.b16 %v40
  %v134 = vunpack.c.l.b16 %v41
  %v135 = vunpack.c.h.b16 %v41
  %v136 = vunpack.c.l.b16 %v42
  %v137 = vunpack.c.h.b16 %v42
  %v138 = vunpack.c.l.b16 %v43
  %v139 = vunpack.c.h.b16 %v43
  %v140 = vunpack.c.l.b16 %v44
  %v141 = vunpack.c.h.b16 %v44
  %v142 = vunpack.c.l.b16 %v45
  %v143 = vunpack.c.h.b16 %v45
  %v144 = vunpack.c.l.b16 %v46
  %v145 = vunpack.c.h.b16 %v46
  %v146 = vunpack.c.l.b16 %v47
  %v147 = vunpack.c.h.b16 %v47
  %v148 = vunpack.c.l.b16 %v48
  %v149 = vunpack.c.h.b16 %v48
  %v150 = vpack.c.b16 %v90, %v86
  %v151 = vpack.c.b16 %v91, %v87
  %v152 = vpack.c.b16 %v92, %v88
  %v153 = vpack.c.b16 %v93, %v89
  %v154 = vpack.c.b16 %v98, %v94
  %v155 = vpack.c.b16 %v99, %v95
  %v156 = vpack.c.b16 %v100, %v96
  %v157 = vpack.c.b16 %v101, %v97
  %v158 = vpack.c.b16 %v106, %v102
  %v159 = vpack.c.b16 %v107, %v103
  %v160 = vpack.c.b16 %v108, %v104
  %v161 = vpack.c.b16 %v109, %v105
  %v162 = vpack.c.b16 %v114, %v110
  %v163 = vpack.c.b16 %v115, %v111
  %v164 = vpack.c.b16 %v116, %v112
  %v165 = vpack.c.b16 %v117, %v113
  %v166 = vpack.c.b16 %v122, %v118
  %v167 = vpack.c.b16 %v123, %v119
  %v168 = vpack.c.b16 %v124, %v120
  %v169 = vpack.c.b16 %v125, %v121
  %v170 = vpack.c.b16 %v130, %v126
  %v171 = vpack.c.b16 %v131, %v127
  %v172 = vpack.c.b16 %v132, %v128
  %v173 = vpack.c.b16 %v133, %v129
  %v174 = vpack.c.b16 %v138, %v134
  %v175 = vpack.c.b16 %v139, %v135
  %v176 = vpack.c.b16 %v140, %v136
  %v177 = vpack.c.b16 %v141, %v137
  %v178 = vpack.c.b16 %v146, %v142
  %v179 = vpack.c.b16 %v147, %v143
  %v180 = vpack.c.b16 %v148, %v144
  %v181 = vpack.c.b16 %v149, %v145
  %214 = vmatpush.bf16.msra.mxu0 %v178
  %215 = vmatpush.bf16.msra.mxu0 %v174
  %216 = vmatpush.bf16.msra.mxu0 %v170
  %217 = vmatpush.bf16.msra.mxu0 %v166
  %218 = vmatpush.bf16.msra.mxu0 %v162
  %219 = vmatpush.bf16.msra.mxu0 %v158
  %220 = vmatpush.bf16.msra.mxu0 %v154
  %221 = vmatpush.bf16.msra.mxu0 %v150
  %222 = vmatmul.bf16.gmra.mxu0 %v53
  %v223 = vpop.f32.mrf.mxu0
  %v224 = vadd.f32 0.0, %v223
  %v225 = vpop.f32.mrf.mxu0
  %226 = vdwg.mxu0
  %227 = vmatpush.bf16.msra.mxu0 %v179
  %228 = vmatpush.bf16.msra.mxu0 %v175
  %229 = vmatpush.bf16.msra.mxu0 %v171
  %230 = vmatpush.bf16.msra.mxu0 %v167
  %231 = vmatpush.bf16.msra.mxu0 %v163
  %232 = vmatpush.bf16.msra.mxu0 %v159
  %233 = vmatpush.bf16.msra.mxu0 %v155
  %234 = vmatpush.bf16.msra.mxu0 %v151
  %235 = vmatmul.bf16.gmra.mxu0 %v53
  %v236 = vpop.f32.mrf.mxu0
  %v237 = vadd.f32 0.0, %v236
  %v238 = vpop.f32.mrf.mxu0
  %239 = vdwg.mxu0
  %240 = vmatpush.bf16.msra.mxu0 %v180
  %241 = vmatpush.bf16.msra.mxu0 %v176
  %242 = vmatpush.bf16.msra.mxu0 %v172
  %243 = vmatpush.bf16.msra.mxu0 %v168
  %244 = vmatpush.bf16.msra.mxu0 %v164
  %245 = vmatpush.bf16.msra.mxu0 %v160
  %246 = vmatpush.bf16.msra.mxu0 %v156
  %247 = vmatpush.bf16.msra.mxu0 %v152
  %248 = vmatmul.bf16.gmra.mxu0 %v53
  %v249 = vpop.f32.mrf.mxu0
  %v250 = vadd.f32 0.0, %v249
  %v251 = vpop.f32.mrf.mxu0
  %252 = vdwg.mxu0
  %253 = vmatpush.bf16.msra.mxu0 %v181
  %254 = vmatpush.bf16.msra.mxu0 %v177
  %255 = vmatpush.bf16.msra.mxu0 %v173
  %256 = vmatpush.bf16.msra.mxu0 %v169
  %257 = vmatpush.bf16.msra.mxu0 %v165
  %258 = vmatpush.bf16.msra.mxu0 %v161
  %259 = vmatpush.bf16.msra.mxu0 %v157
  %260 = vmatpush.bf16.msra.mxu0 %v153
  %261 = vmatmul.bf16.gmra.mxu0 %v53
  %v262 = vpop.f32.mrf.mxu0
  %v263 = vadd.f32 0.0, %v262
  %v264 = vpop.f32.mrf.mxu0
  %265 = vdwg.mxu0
  %v270 = vrot.slane %v237, 6
  %v271 = vrot.slane %v250, 4
  %v272 = vrot.slane %v263, 2
  %vm273 = vcmask 1041408
  %v274 = vsel %vm273, %v224, %v270
  %vm275 = vcmask 1045508
  %v276 = vsel %vm275, %v271, %v272
  %vm277 = vcmask 1043456
  %v278 = vsel %vm277, %v274, %v276
  %v280 = vadd.f32 %v52, %v278
  %v281 = vmul.f32 %v280, 0.5
  %v282 = vtanh.pop %v281
  %v283 = vmul.f32 %v282, 0.5
  %v284 = vadd.f32 %v283, 0.5
  %v286 = vrot.slane %v280, 2
  %v288 = vmul.f32 %v286, 0.5
  %v289 = vtanh.pop %v288
  %v290 = vmul.f32 %v289, 0.5
  %v291 = vadd.f32 %v290, 0.5
  %v292 = vrot.slane %v280, 4
  %v294 = vtanh.pop %v292
  %v295 = vrot.slane %v280, 6
  %v297 = vmul.f32 %v295, 0.5
  %v298 = vtanh.pop %v297
  %v299 = vmul.f32 %v298, 0.5
  %v300 = vadd.f32 %v299, 0.5
  %v301 = vmul.f32 %v291, %v50
  %v302 = vmul.f32 %v284, %v294
  %v303 = vadd.f32 %v301, %v302
  %v304 = vtanh.pop %v303
  %v305 = vmul.f32 %v300, %v304
  %v306 = vpack.c.bf16 %v305, %v305
  %307 = vst [vmem:[%s2] sm:$0x1] %v306
  %s308 = scalar_lea.vmem %s0, 4
  %v309 = vld [vmem:[%s308] sm:$0xf]
  %v310 = vunpack.c.l.bf16 %v309
  %311 = vmatpush.bf16.msra.mxu0 %v178
  %312 = vmatpush.bf16.msra.mxu0 %v174
  %313 = vmatpush.bf16.msra.mxu0 %v170
  %314 = vmatpush.bf16.msra.mxu0 %v166
  %315 = vmatpush.bf16.msra.mxu0 %v162
  %316 = vmatpush.bf16.msra.mxu0 %v158
  %317 = vmatpush.bf16.msra.mxu0 %v154
  %318 = vmatpush.bf16.msra.mxu0 %v150
  %319 = vmatmul.bf16.gmra.mxu0 %v306
  %v320 = vpop.f32.mrf.mxu0
  %v321 = vadd.f32 0.0, %v320
  %v322 = vpop.f32.mrf.mxu0
  %323 = vdwg.mxu0
  %324 = vmatpush.bf16.msra.mxu0 %v179
  %325 = vmatpush.bf16.msra.mxu0 %v175
  %326 = vmatpush.bf16.msra.mxu0 %v171
  %327 = vmatpush.bf16.msra.mxu0 %v167
  %328 = vmatpush.bf16.msra.mxu0 %v163
  %329 = vmatpush.bf16.msra.mxu0 %v159
  %330 = vmatpush.bf16.msra.mxu0 %v155
  %331 = vmatpush.bf16.msra.mxu0 %v151
  %332 = vmatmul.bf16.gmra.mxu0 %v306
  %v333 = vpop.f32.mrf.mxu0
  %v334 = vadd.f32 0.0, %v333
  %v335 = vpop.f32.mrf.mxu0
  %336 = vdwg.mxu0
  %337 = vmatpush.bf16.msra.mxu0 %v180
  %338 = vmatpush.bf16.msra.mxu0 %v176
  %339 = vmatpush.bf16.msra.mxu0 %v172
  %340 = vmatpush.bf16.msra.mxu0 %v168
  %341 = vmatpush.bf16.msra.mxu0 %v164
  %342 = vmatpush.bf16.msra.mxu0 %v160
  %343 = vmatpush.bf16.msra.mxu0 %v156
  %344 = vmatpush.bf16.msra.mxu0 %v152
  %345 = vmatmul.bf16.gmra.mxu0 %v306
  %v346 = vpop.f32.mrf.mxu0
  %v347 = vadd.f32 0.0, %v346
  %v348 = vpop.f32.mrf.mxu0
  %349 = vdwg.mxu0
  %350 = vmatpush.bf16.msra.mxu0 %v181
  %351 = vmatpush.bf16.msra.mxu0 %v177
  %352 = vmatpush.bf16.msra.mxu0 %v173
  %353 = vmatpush.bf16.msra.mxu0 %v169
  %354 = vmatpush.bf16.msra.mxu0 %v165
  %355 = vmatpush.bf16.msra.mxu0 %v161
  %356 = vmatpush.bf16.msra.mxu0 %v157
  %357 = vmatpush.bf16.msra.mxu0 %v153
  %358 = vmatmul.bf16.gmra.mxu0 %v306
  %v359 = vpop.f32.mrf.mxu0
  %v360 = vadd.f32 0.0, %v359
  %v361 = vpop.f32.mrf.mxu0
  %362 = vdwg.mxu0
  %v367 = vrot.slane %v334, 6
  %v368 = vrot.slane %v347, 4
  %v369 = vrot.slane %v360, 2
  %v370 = vsel %vm273, %v321, %v367
  %v371 = vsel %vm275, %v368, %v369
  %v372 = vsel %vm277, %v370, %v371
  %v374 = vadd.f32 %v310, %v372
  %v375 = vmul.f32 %v374, 0.5
  %v376 = vtanh.pop %v375
  %v377 = vmul.f32 %v376, 0.5
  %v378 = vadd.f32 %v377, 0.5
  %v380 = vrot.slane %v374, 2
  %v382 = vmul.f32 %v380, 0.5
  %v383 = vtanh.pop %v382
  %v384 = vmul.f32 %v383, 0.5
  %v385 = vadd.f32 %v384, 0.5
  %v386 = vrot.slane %v374, 4
  %v388 = vtanh.pop %v386
  %v389 = vrot.slane %v374, 6
  %v391 = vmul.f32 %v389, 0.5
  %v392 = vtanh.pop %v391
  %v393 = vmul.f32 %v392, 0.5
  %v394 = vadd.f32 %v393, 0.5
  %v395 = vmul.f32 %v385, %v303
  %v396 = vmul.f32 %v378, %v388
  %v397 = vadd.f32 %v395, %v396
  %v398 = vtanh.pop %v397
  %v399 = vmul.f32 %v394, %v398
  %v400 = vpack.c.bf16 %v399, %v399
  %s401 = scalar_lea.vmem %s2, 1
  %402 = vst [vmem:[%s401] sm:$0x1] %v400
  %s403 = scalar_lea.vmem %s0, 8
  %v404 = vld [vmem:[%s403] sm:$0xf]
  %v405 = vunpack.c.l.bf16 %v404
  %406 = vmatpush.bf16.msra.mxu0 %v178
  %407 = vmatpush.bf16.msra.mxu0 %v174
  %408 = vmatpush.bf16.msra.mxu0 %v170
  %409 = vmatpush.bf16.msra.mxu0 %v166
  %410 = vmatpush.bf16.msra.mxu0 %v162
  %411 = vmatpush.bf16.msra.mxu0 %v158
  %412 = vmatpush.bf16.msra.mxu0 %v154
  %413 = vmatpush.bf16.msra.mxu0 %v150
  %414 = vmatmul.bf16.gmra.mxu0 %v400
  %v415 = vpop.f32.mrf.mxu0
  %v416 = vadd.f32 0.0, %v415
  %v417 = vpop.f32.mrf.mxu0
  %418 = vdwg.mxu0
  %419 = vmatpush.bf16.msra.mxu0 %v179
  %420 = vmatpush.bf16.msra.mxu0 %v175
  %421 = vmatpush.bf16.msra.mxu0 %v171
  %422 = vmatpush.bf16.msra.mxu0 %v167
  %423 = vmatpush.bf16.msra.mxu0 %v163
  %424 = vmatpush.bf16.msra.mxu0 %v159
  %425 = vmatpush.bf16.msra.mxu0 %v155
  %426 = vmatpush.bf16.msra.mxu0 %v151
  %427 = vmatmul.bf16.gmra.mxu0 %v400
  %v428 = vpop.f32.mrf.mxu0
  %v429 = vadd.f32 0.0, %v428
  %v430 = vpop.f32.mrf.mxu0
  %431 = vdwg.mxu0
  %432 = vmatpush.bf16.msra.mxu0 %v180
  %433 = vmatpush.bf16.msra.mxu0 %v176
  %434 = vmatpush.bf16.msra.mxu0 %v172
  %435 = vmatpush.bf16.msra.mxu0 %v168
  %436 = vmatpush.bf16.msra.mxu0 %v164
  %437 = vmatpush.bf16.msra.mxu0 %v160
  %438 = vmatpush.bf16.msra.mxu0 %v156
  %439 = vmatpush.bf16.msra.mxu0 %v152
  %440 = vmatmul.bf16.gmra.mxu0 %v400
  %v441 = vpop.f32.mrf.mxu0
  %v442 = vadd.f32 0.0, %v441
  %v443 = vpop.f32.mrf.mxu0
  %444 = vdwg.mxu0
  %445 = vmatpush.bf16.msra.mxu0 %v181
  %446 = vmatpush.bf16.msra.mxu0 %v177
  %447 = vmatpush.bf16.msra.mxu0 %v173
  %448 = vmatpush.bf16.msra.mxu0 %v169
  %449 = vmatpush.bf16.msra.mxu0 %v165
  %450 = vmatpush.bf16.msra.mxu0 %v161
  %451 = vmatpush.bf16.msra.mxu0 %v157
  %452 = vmatpush.bf16.msra.mxu0 %v153
  %453 = vmatmul.bf16.gmra.mxu0 %v400
  %v454 = vpop.f32.mrf.mxu0
  %v455 = vadd.f32 0.0, %v454
  %v456 = vpop.f32.mrf.mxu0
  %457 = vdwg.mxu0
  %v462 = vrot.slane %v429, 6
  %v463 = vrot.slane %v442, 4
  %v464 = vrot.slane %v455, 2
  %v465 = vsel %vm273, %v416, %v462
  %v466 = vsel %vm275, %v463, %v464
  %v467 = vsel %vm277, %v465, %v466
  %v469 = vadd.f32 %v405, %v467
  %v470 = vmul.f32 %v469, 0.5
  %v471 = vtanh.pop %v470
  %v472 = vmul.f32 %v471, 0.5
  %v473 = vadd.f32 %v472, 0.5
  %v475 = vrot.slane %v469, 2
  %v477 = vmul.f32 %v475, 0.5
  %v478 = vtanh.pop %v477
  %v479 = vmul.f32 %v478, 0.5
  %v480 = vadd.f32 %v479, 0.5
  %v481 = vrot.slane %v469, 4
  %v483 = vtanh.pop %v481
  %v484 = vrot.slane %v469, 6
  %v486 = vmul.f32 %v484, 0.5
  %v487 = vtanh.pop %v486
  %v488 = vmul.f32 %v487, 0.5
  %v489 = vadd.f32 %v488, 0.5
  %v490 = vmul.f32 %v480, %v397
  %v491 = vmul.f32 %v473, %v483
  %v492 = vadd.f32 %v490, %v491
  %v493 = vtanh.pop %v492
  %v494 = vmul.f32 %v489, %v493
  %v495 = vpack.c.bf16 %v494, %v494
  %s496 = scalar_lea.vmem %s2, 2
  %497 = vst [vmem:[%s496] sm:$0x1] %v495
  %s498 = scalar_lea.vmem %s0, 12
  %v499 = vld [vmem:[%s498] sm:$0xf]
  %v500 = vunpack.c.l.bf16 %v499
  %501 = vmatpush.bf16.msra.mxu0 %v178
  %502 = vmatpush.bf16.msra.mxu0 %v174
  %503 = vmatpush.bf16.msra.mxu0 %v170
  %504 = vmatpush.bf16.msra.mxu0 %v166
  %505 = vmatpush.bf16.msra.mxu0 %v162
  %506 = vmatpush.bf16.msra.mxu0 %v158
  %507 = vmatpush.bf16.msra.mxu0 %v154
  %508 = vmatpush.bf16.msra.mxu0 %v150
  %509 = vmatmul.bf16.gmra.mxu0 %v495
  %v510 = vpop.f32.mrf.mxu0
  %v511 = vadd.f32 0.0, %v510
  %v512 = vpop.f32.mrf.mxu0
  %513 = vdwg.mxu0
  %514 = vmatpush.bf16.msra.mxu0 %v179
  %515 = vmatpush.bf16.msra.mxu0 %v175
  %516 = vmatpush.bf16.msra.mxu0 %v171
  %517 = vmatpush.bf16.msra.mxu0 %v167
  %518 = vmatpush.bf16.msra.mxu0 %v163
  %519 = vmatpush.bf16.msra.mxu0 %v159
  %520 = vmatpush.bf16.msra.mxu0 %v155
  %521 = vmatpush.bf16.msra.mxu0 %v151
  %522 = vmatmul.bf16.gmra.mxu0 %v495
  %v523 = vpop.f32.mrf.mxu0
  %v524 = vadd.f32 0.0, %v523
  %v525 = vpop.f32.mrf.mxu0
  %526 = vdwg.mxu0
  %527 = vmatpush.bf16.msra.mxu0 %v180
  %528 = vmatpush.bf16.msra.mxu0 %v176
  %529 = vmatpush.bf16.msra.mxu0 %v172
  %530 = vmatpush.bf16.msra.mxu0 %v168
  %531 = vmatpush.bf16.msra.mxu0 %v164
  %532 = vmatpush.bf16.msra.mxu0 %v160
  %533 = vmatpush.bf16.msra.mxu0 %v156
  %534 = vmatpush.bf16.msra.mxu0 %v152
  %535 = vmatmul.bf16.gmra.mxu0 %v495
  %v536 = vpop.f32.mrf.mxu0
  %v537 = vadd.f32 0.0, %v536
  %v538 = vpop.f32.mrf.mxu0
  %539 = vdwg.mxu0
  %540 = vmatpush.bf16.msra.mxu0 %v181
  %541 = vmatpush.bf16.msra.mxu0 %v177
  %542 = vmatpush.bf16.msra.mxu0 %v173
  %543 = vmatpush.bf16.msra.mxu0 %v169
  %544 = vmatpush.bf16.msra.mxu0 %v165
  %545 = vmatpush.bf16.msra.mxu0 %v161
  %546 = vmatpush.bf16.msra.mxu0 %v157
  %547 = vmatpush.bf16.msra.mxu0 %v153
  %548 = vmatmul.bf16.gmra.mxu0 %v495
  %v549 = vpop.f32.mrf.mxu0
  %v550 = vadd.f32 0.0, %v549
  %v551 = vpop.f32.mrf.mxu0
  %552 = vdwg.mxu0
  %v557 = vrot.slane %v524, 6
  %v558 = vrot.slane %v537, 4
  %v559 = vrot.slane %v550, 2
  %v560 = vsel %vm273, %v511, %v557
  %v561 = vsel %vm275, %v558, %v559
  %v562 = vsel %vm277, %v560, %v561
  %v564 = vadd.f32 %v500, %v562
  %v565 = vmul.f32 %v564, 0.5
  %v566 = vtanh.pop %v565
  %v567 = vmul.f32 %v566, 0.5
  %v568 = vadd.f32 %v567, 0.5
  %v570 = vrot.slane %v564, 2
  %v572 = vmul.f32 %v570, 0.5
  %v573 = vtanh.pop %v572
  %v574 = vmul.f32 %v573, 0.5
  %v575 = vadd.f32 %v574, 0.5
  %v576 = vrot.slane %v564, 4
  %v578 = vtanh.pop %v576
  %v579 = vrot.slane %v564, 6
  %v581 = vmul.f32 %v579, 0.5
  %v582 = vtanh.pop %v581
  %v583 = vmul.f32 %v582, 0.5
  %v584 = vadd.f32 %v583, 0.5
  %v585 = vmul.f32 %v575, %v492
  %v586 = vmul.f32 %v568, %v578
  %v587 = vadd.f32 %v585, %v586
  %v588 = vtanh.pop %v587
  %v589 = vmul.f32 %v584, %v588
  %v590 = vpack.c.bf16 %v589, %v589
  %s591 = scalar_lea.vmem %s2, 3
  %592 = vst [vmem:[%s591] sm:$0x1] %v590
  %s593 = scalar_lea.vmem %s0, 16
  %v594 = vld [vmem:[%s593] sm:$0xf]
  %v595 = vunpack.c.l.bf16 %v594
  %596 = vmatpush.bf16.msra.mxu0 %v178
  %597 = vmatpush.bf16.msra.mxu0 %v174
  %598 = vmatpush.bf16.msra.mxu0 %v170
  %599 = vmatpush.bf16.msra.mxu0 %v166
  %600 = vmatpush.bf16.msra.mxu0 %v162
  %601 = vmatpush.bf16.msra.mxu0 %v158
  %602 = vmatpush.bf16.msra.mxu0 %v154
  %603 = vmatpush.bf16.msra.mxu0 %v150
  %604 = vmatmul.bf16.gmra.mxu0 %v590
  %v605 = vpop.f32.mrf.mxu0
  %v606 = vadd.f32 0.0, %v605
  %v607 = vpop.f32.mrf.mxu0
  %608 = vdwg.mxu0
  %609 = vmatpush.bf16.msra.mxu0 %v179
  %610 = vmatpush.bf16.msra.mxu0 %v175
  %611 = vmatpush.bf16.msra.mxu0 %v171
  %612 = vmatpush.bf16.msra.mxu0 %v167
  %613 = vmatpush.bf16.msra.mxu0 %v163
  %614 = vmatpush.bf16.msra.mxu0 %v159
  %615 = vmatpush.bf16.msra.mxu0 %v155
  %616 = vmatpush.bf16.msra.mxu0 %v151
  %617 = vmatmul.bf16.gmra.mxu0 %v590
  %v618 = vpop.f32.mrf.mxu0
  %v619 = vadd.f32 0.0, %v618
  %v620 = vpop.f32.mrf.mxu0
  %621 = vdwg.mxu0
  %622 = vmatpush.bf16.msra.mxu0 %v180
  %623 = vmatpush.bf16.msra.mxu0 %v176
  %624 = vmatpush.bf16.msra.mxu0 %v172
  %625 = vmatpush.bf16.msra.mxu0 %v168
  %626 = vmatpush.bf16.msra.mxu0 %v164
  %627 = vmatpush.bf16.msra.mxu0 %v160
  %628 = vmatpush.bf16.msra.mxu0 %v156
  %629 = vmatpush.bf16.msra.mxu0 %v152
  %630 = vmatmul.bf16.gmra.mxu0 %v590
  %v631 = vpop.f32.mrf.mxu0
  %v632 = vadd.f32 0.0, %v631
  %v633 = vpop.f32.mrf.mxu0
  %634 = vdwg.mxu0
  %635 = vmatpush.bf16.msra.mxu0 %v181
  %636 = vmatpush.bf16.msra.mxu0 %v177
  %637 = vmatpush.bf16.msra.mxu0 %v173
  %638 = vmatpush.bf16.msra.mxu0 %v169
  %639 = vmatpush.bf16.msra.mxu0 %v165
  %640 = vmatpush.bf16.msra.mxu0 %v161
  %641 = vmatpush.bf16.msra.mxu0 %v157
  %642 = vmatpush.bf16.msra.mxu0 %v153
  %643 = vmatmul.bf16.gmra.mxu0 %v590
  %v644 = vpop.f32.mrf.mxu0
  %v645 = vadd.f32 0.0, %v644
  %v646 = vpop.f32.mrf.mxu0
  %647 = vdwg.mxu0
  %v652 = vrot.slane %v619, 6
  %v653 = vrot.slane %v632, 4
  %v654 = vrot.slane %v645, 2
  %v655 = vsel %vm273, %v606, %v652
  %v656 = vsel %vm275, %v653, %v654
  %v657 = vsel %vm277, %v655, %v656
  %v659 = vadd.f32 %v595, %v657
  %v660 = vmul.f32 %v659, 0.5
  %v661 = vtanh.pop %v660
  %v662 = vmul.f32 %v661, 0.5
  %v663 = vadd.f32 %v662, 0.5
  %v665 = vrot.slane %v659, 2
  %v667 = vmul.f32 %v665, 0.5
  %v668 = vtanh.pop %v667
  %v669 = vmul.f32 %v668, 0.5
  %v670 = vadd.f32 %v669, 0.5
  %v671 = vrot.slane %v659, 4
  %v673 = vtanh.pop %v671
  %v674 = vrot.slane %v659, 6
  %v676 = vmul.f32 %v674, 0.5
  %v677 = vtanh.pop %v676
  %v678 = vmul.f32 %v677, 0.5
  %v679 = vadd.f32 %v678, 0.5
  %v680 = vmul.f32 %v670, %v587
  %v681 = vmul.f32 %v663, %v673
  %v682 = vadd.f32 %v680, %v681
  %v683 = vtanh.pop %v682
  %v684 = vmul.f32 %v679, %v683
  %v685 = vpack.c.bf16 %v684, %v684
  %s686 = scalar_lea.vmem %s2, 4
  %687 = vst [vmem:[%s686] sm:$0x1] %v685
  %s688 = scalar_lea.vmem %s0, 20
  %v689 = vld [vmem:[%s688] sm:$0xf]
  %v690 = vunpack.c.l.bf16 %v689
  %691 = vmatpush.bf16.msra.mxu0 %v178
  %692 = vmatpush.bf16.msra.mxu0 %v174
  %693 = vmatpush.bf16.msra.mxu0 %v170
  %694 = vmatpush.bf16.msra.mxu0 %v166
  %695 = vmatpush.bf16.msra.mxu0 %v162
  %696 = vmatpush.bf16.msra.mxu0 %v158
  %697 = vmatpush.bf16.msra.mxu0 %v154
  %698 = vmatpush.bf16.msra.mxu0 %v150
  %699 = vmatmul.bf16.gmra.mxu0 %v685
  %v700 = vpop.f32.mrf.mxu0
  %v701 = vadd.f32 0.0, %v700
  %v702 = vpop.f32.mrf.mxu0
  %703 = vdwg.mxu0
  %704 = vmatpush.bf16.msra.mxu0 %v179
  %705 = vmatpush.bf16.msra.mxu0 %v175
  %706 = vmatpush.bf16.msra.mxu0 %v171
  %707 = vmatpush.bf16.msra.mxu0 %v167
  %708 = vmatpush.bf16.msra.mxu0 %v163
  %709 = vmatpush.bf16.msra.mxu0 %v159
  %710 = vmatpush.bf16.msra.mxu0 %v155
  %711 = vmatpush.bf16.msra.mxu0 %v151
  %712 = vmatmul.bf16.gmra.mxu0 %v685
  %v713 = vpop.f32.mrf.mxu0
  %v714 = vadd.f32 0.0, %v713
  %v715 = vpop.f32.mrf.mxu0
  %716 = vdwg.mxu0
  %717 = vmatpush.bf16.msra.mxu0 %v180
  %718 = vmatpush.bf16.msra.mxu0 %v176
  %719 = vmatpush.bf16.msra.mxu0 %v172
  %720 = vmatpush.bf16.msra.mxu0 %v168
  %721 = vmatpush.bf16.msra.mxu0 %v164
  %722 = vmatpush.bf16.msra.mxu0 %v160
  %723 = vmatpush.bf16.msra.mxu0 %v156
  %724 = vmatpush.bf16.msra.mxu0 %v152
  %725 = vmatmul.bf16.gmra.mxu0 %v685
  %v726 = vpop.f32.mrf.mxu0
  %v727 = vadd.f32 0.0, %v726
  %v728 = vpop.f32.mrf.mxu0
  %729 = vdwg.mxu0
  %730 = vmatpush.bf16.msra.mxu0 %v181
  %731 = vmatpush.bf16.msra.mxu0 %v177
  %732 = vmatpush.bf16.msra.mxu0 %v173
  %733 = vmatpush.bf16.msra.mxu0 %v169
  %734 = vmatpush.bf16.msra.mxu0 %v165
  %735 = vmatpush.bf16.msra.mxu0 %v161
  %736 = vmatpush.bf16.msra.mxu0 %v157
  %737 = vmatpush.bf16.msra.mxu0 %v153
  %738 = vmatmul.bf16.gmra.mxu0 %v685
  %v739 = vpop.f32.mrf.mxu0
  %v740 = vadd.f32 0.0, %v739
  %v741 = vpop.f32.mrf.mxu0
  %742 = vdwg.mxu0
  %v747 = vrot.slane %v714, 6
  %v748 = vrot.slane %v727, 4
  %v749 = vrot.slane %v740, 2
  %v750 = vsel %vm273, %v701, %v747
  %v751 = vsel %vm275, %v748, %v749
  %v752 = vsel %vm277, %v750, %v751
  %v754 = vadd.f32 %v690, %v752
  %v755 = vmul.f32 %v754, 0.5
  %v756 = vtanh.pop %v755
  %v757 = vmul.f32 %v756, 0.5
  %v758 = vadd.f32 %v757, 0.5
  %v760 = vrot.slane %v754, 2
  %v762 = vmul.f32 %v760, 0.5
  %v763 = vtanh.pop %v762
  %v764 = vmul.f32 %v763, 0.5
  %v765 = vadd.f32 %v764, 0.5
  %v766 = vrot.slane %v754, 4
  %v768 = vtanh.pop %v766
  %v769 = vrot.slane %v754, 6
  %v771 = vmul.f32 %v769, 0.5
  %v772 = vtanh.pop %v771
  %v773 = vmul.f32 %v772, 0.5
  %v774 = vadd.f32 %v773, 0.5
  %v775 = vmul.f32 %v765, %v682
  %v776 = vmul.f32 %v758, %v768
  %v777 = vadd.f32 %v775, %v776
  %v778 = vtanh.pop %v777
  %v779 = vmul.f32 %v774, %v778
  %v780 = vpack.c.bf16 %v779, %v779
  %s781 = scalar_lea.vmem %s2, 5
  %782 = vst [vmem:[%s781] sm:$0x1] %v780
  %s783 = scalar_lea.vmem %s0, 24
  %v784 = vld [vmem:[%s783] sm:$0xf]
  %v785 = vunpack.c.l.bf16 %v784
  %786 = vmatpush.bf16.msra.mxu0 %v178
  %787 = vmatpush.bf16.msra.mxu0 %v174
  %788 = vmatpush.bf16.msra.mxu0 %v170
  %789 = vmatpush.bf16.msra.mxu0 %v166
  %790 = vmatpush.bf16.msra.mxu0 %v162
  %791 = vmatpush.bf16.msra.mxu0 %v158
  %792 = vmatpush.bf16.msra.mxu0 %v154
  %793 = vmatpush.bf16.msra.mxu0 %v150
  %794 = vmatmul.bf16.gmra.mxu0 %v780
  %v795 = vpop.f32.mrf.mxu0
  %v796 = vadd.f32 0.0, %v795
  %v797 = vpop.f32.mrf.mxu0
  %798 = vdwg.mxu0
  %799 = vmatpush.bf16.msra.mxu0 %v179
  %800 = vmatpush.bf16.msra.mxu0 %v175
  %801 = vmatpush.bf16.msra.mxu0 %v171
  %802 = vmatpush.bf16.msra.mxu0 %v167
  %803 = vmatpush.bf16.msra.mxu0 %v163
  %804 = vmatpush.bf16.msra.mxu0 %v159
  %805 = vmatpush.bf16.msra.mxu0 %v155
  %806 = vmatpush.bf16.msra.mxu0 %v151
  %807 = vmatmul.bf16.gmra.mxu0 %v780
  %v808 = vpop.f32.mrf.mxu0
  %v809 = vadd.f32 0.0, %v808
  %v810 = vpop.f32.mrf.mxu0
  %811 = vdwg.mxu0
  %812 = vmatpush.bf16.msra.mxu0 %v180
  %813 = vmatpush.bf16.msra.mxu0 %v176
  %814 = vmatpush.bf16.msra.mxu0 %v172
  %815 = vmatpush.bf16.msra.mxu0 %v168
  %816 = vmatpush.bf16.msra.mxu0 %v164
  %817 = vmatpush.bf16.msra.mxu0 %v160
  %818 = vmatpush.bf16.msra.mxu0 %v156
  %819 = vmatpush.bf16.msra.mxu0 %v152
  %820 = vmatmul.bf16.gmra.mxu0 %v780
  %v821 = vpop.f32.mrf.mxu0
  %v822 = vadd.f32 0.0, %v821
  %v823 = vpop.f32.mrf.mxu0
  %824 = vdwg.mxu0
  %825 = vmatpush.bf16.msra.mxu0 %v181
  %826 = vmatpush.bf16.msra.mxu0 %v177
  %827 = vmatpush.bf16.msra.mxu0 %v173
  %828 = vmatpush.bf16.msra.mxu0 %v169
  %829 = vmatpush.bf16.msra.mxu0 %v165
  %830 = vmatpush.bf16.msra.mxu0 %v161
  %831 = vmatpush.bf16.msra.mxu0 %v157
  %832 = vmatpush.bf16.msra.mxu0 %v153
  %833 = vmatmul.bf16.gmra.mxu0 %v780
  %v834 = vpop.f32.mrf.mxu0
  %v835 = vadd.f32 0.0, %v834
  %v836 = vpop.f32.mrf.mxu0
  %837 = vdwg.mxu0
  %v842 = vrot.slane %v809, 6
  %v843 = vrot.slane %v822, 4
  %v844 = vrot.slane %v835, 2
  %v845 = vsel %vm273, %v796, %v842
  %v846 = vsel %vm275, %v843, %v844
  %v847 = vsel %vm277, %v845, %v846
  %v849 = vadd.f32 %v785, %v847
  %v850 = vmul.f32 %v849, 0.5
  %v851 = vtanh.pop %v850
  %v852 = vmul.f32 %v851, 0.5
  %v853 = vadd.f32 %v852, 0.5
  %v855 = vrot.slane %v849, 2
  %v857 = vmul.f32 %v855, 0.5
  %v858 = vtanh.pop %v857
  %v859 = vmul.f32 %v858, 0.5
  %v860 = vadd.f32 %v859, 0.5
  %v861 = vrot.slane %v849, 4
  %v863 = vtanh.pop %v861
  %v864 = vrot.slane %v849, 6
  %v866 = vmul.f32 %v864, 0.5
  %v867 = vtanh.pop %v866
  %v868 = vmul.f32 %v867, 0.5
  %v869 = vadd.f32 %v868, 0.5
  %v870 = vmul.f32 %v860, %v777
  %v871 = vmul.f32 %v853, %v863
  %v872 = vadd.f32 %v870, %v871
  %v873 = vtanh.pop %v872
  %v874 = vmul.f32 %v869, %v873
  %v875 = vpack.c.bf16 %v874, %v874
  %s876 = scalar_lea.vmem %s2, 6
  %877 = vst [vmem:[%s876] sm:$0x1] %v875
  %s878 = scalar_lea.vmem %s0, 28
  %v879 = vld [vmem:[%s878] sm:$0xf]
  %v880 = vunpack.c.l.bf16 %v879
  %881 = vmatpush.bf16.msra.mxu0 %v178
  %882 = vmatpush.bf16.msra.mxu0 %v174
  %883 = vmatpush.bf16.msra.mxu0 %v170
  %884 = vmatpush.bf16.msra.mxu0 %v166
  %885 = vmatpush.bf16.msra.mxu0 %v162
  %886 = vmatpush.bf16.msra.mxu0 %v158
  %887 = vmatpush.bf16.msra.mxu0 %v154
  %888 = vmatpush.bf16.msra.mxu0 %v150
  %889 = vmatmul.bf16.gmra.mxu0 %v875
  %v890 = vpop.f32.mrf.mxu0
  %v891 = vadd.f32 0.0, %v890
  %v892 = vpop.f32.mrf.mxu0
  %893 = vdwg.mxu0
  %894 = vmatpush.bf16.msra.mxu0 %v179
  %895 = vmatpush.bf16.msra.mxu0 %v175
  %896 = vmatpush.bf16.msra.mxu0 %v171
  %897 = vmatpush.bf16.msra.mxu0 %v167
  %898 = vmatpush.bf16.msra.mxu0 %v163
  %899 = vmatpush.bf16.msra.mxu0 %v159
  %900 = vmatpush.bf16.msra.mxu0 %v155
  %901 = vmatpush.bf16.msra.mxu0 %v151
  %902 = vmatmul.bf16.gmra.mxu0 %v875
  %v903 = vpop.f32.mrf.mxu0
  %v904 = vadd.f32 0.0, %v903
  %v905 = vpop.f32.mrf.mxu0
  %906 = vdwg.mxu0
  %907 = vmatpush.bf16.msra.mxu0 %v180
  %908 = vmatpush.bf16.msra.mxu0 %v176
  %909 = vmatpush.bf16.msra.mxu0 %v172
  %910 = vmatpush.bf16.msra.mxu0 %v168
  %911 = vmatpush.bf16.msra.mxu0 %v164
  %912 = vmatpush.bf16.msra.mxu0 %v160
  %913 = vmatpush.bf16.msra.mxu0 %v156
  %914 = vmatpush.bf16.msra.mxu0 %v152
  %915 = vmatmul.bf16.gmra.mxu0 %v875
  %v916 = vpop.f32.mrf.mxu0
  %v917 = vadd.f32 0.0, %v916
  %v918 = vpop.f32.mrf.mxu0
  %919 = vdwg.mxu0
  %920 = vmatpush.bf16.msra.mxu0 %v181
  %921 = vmatpush.bf16.msra.mxu0 %v177
  %922 = vmatpush.bf16.msra.mxu0 %v173
  %923 = vmatpush.bf16.msra.mxu0 %v169
  %924 = vmatpush.bf16.msra.mxu0 %v165
  %925 = vmatpush.bf16.msra.mxu0 %v161
  %926 = vmatpush.bf16.msra.mxu0 %v157
  %927 = vmatpush.bf16.msra.mxu0 %v153
  %928 = vmatmul.bf16.gmra.mxu0 %v875
  %v929 = vpop.f32.mrf.mxu0
  %v930 = vadd.f32 0.0, %v929
  %v931 = vpop.f32.mrf.mxu0
  %932 = vdwg.mxu0
  %v937 = vrot.slane %v904, 6
  %v938 = vrot.slane %v917, 4
  %v939 = vrot.slane %v930, 2
  %v940 = vsel %vm273, %v891, %v937
  %v941 = vsel %vm275, %v938, %v939
  %v942 = vsel %vm277, %v940, %v941
  %v944 = vadd.f32 %v880, %v942
  %v945 = vmul.f32 %v944, 0.5
  %v946 = vtanh.pop %v945
  %v947 = vmul.f32 %v946, 0.5
  %v948 = vadd.f32 %v947, 0.5
  %v950 = vrot.slane %v944, 2
  %v952 = vmul.f32 %v950, 0.5
  %v953 = vtanh.pop %v952
  %v954 = vmul.f32 %v953, 0.5
  %v955 = vadd.f32 %v954, 0.5
  %v956 = vrot.slane %v944, 4
  %v958 = vtanh.pop %v956
  %v959 = vrot.slane %v944, 6
  %v961 = vmul.f32 %v959, 0.5
  %v962 = vtanh.pop %v961
  %v963 = vmul.f32 %v962, 0.5
  %v964 = vadd.f32 %v963, 0.5
  %v965 = vmul.f32 %v955, %v872
  %v966 = vmul.f32 %v948, %v958
  %v967 = vadd.f32 %v965, %v966
  %v968 = vtanh.pop %v967
  %v969 = vmul.f32 %v964, %v968
  %v970 = vpack.c.bf16 %v969, %v969
  %s971 = scalar_lea.vmem %s2, 7
  %972 = vst [vmem:[%s971] sm:$0x1] %v970
  %973 = vst [vmem:[#allocation2] sm:$0x3] %v969
  %974 = vst [vmem:[#allocation3] sm:$0x3] %v967
  // Predicated region
  $region14: #{_lambda_.4} parent=0 // pred_check
    _
  $region15: #{_lambda_.4} parent=0 // pred_check_branch
    %976 = sbr.rel (0) target = $region17
  $region16: #{_lambda_.4} parent=0 // pred_region
    _
  $region17: #{_lambda_.4} parent=0 // pred_fallthru
    _
  // Predicated region
  $region18: #{_lambda_.4} parent=0 // pred_check
    _
  $region19: #{_lambda_.4} parent=0 // pred_check_branch
    %978 = sbr.rel (0) target = $region21
  $region20: #{_lambda_.4} parent=0 // pred_region
    _
  $region21: #{_lambda_.4} parent=0 // pred_fallthru
    _

</llo_original>
